<compile_context>
chip_gen: v5e
topology: v5e:2x2
jax: 0.10.0
libtpu: 0.0.40
codegen_flags: <defaults>
</compile_context>

<pallas_src>
import functools

import jax
import jax.numpy as jnp
from jax.experimental import pallas as pl
from jax.experimental.pallas import tpu as pltpu

_BN_EPS = 1e-5


# ---------------------------------------------------------------------------
# packed-weight slab layout (shared by wrapper packing and in-kernel slicing)
# ---------------------------------------------------------------------------
def _rup(n, m):
    return -(-n // m) * m


def _slab_layout(Cin, S, Cc, A):
    """Row offsets (multiples of 8) for each parameter inside one (R,128) slab."""
    entries = (
        ("w0", (S, 9 * Cin)),        # im2col conv0 weight
        ("w12", (2 * S, S)),         # stacked [W1; W2@W1]
        ("wd1", (S, 9)),             # depthwise taps
        ("wd2", (S, 9)),
        ("wc", (Cc, A)),             # pointwise concat weight
        ("bias", (max(2 * S, Cc), 5)),  # col0=b12, col1=b0, col2=bd1, col3=bd2, col4=bc
    )
    layout, r, maxc = {}, 0, 0
    for name, (nr, nc) in entries:
        layout[name] = (r, nr, nc)
        r += _rup(nr, 8)
        maxc = max(maxc, nc)
    return layout, _rup(r, 8), _rup(maxc, 128)


# ---------------------------------------------------------------------------
# the Pallas kernel: full _OSA forward for Bf images on a (C, Bf*H*W) slab
# ---------------------------------------------------------------------------
def _osa_kernel(identity, H, W, Cin, S, Cc, A, Bf, layout,
                x_ref, wslab_ref, esa_ref, out_ref):
    HW = H * W
    L = Bf * HW

    # ---- activations: fold Bf batch elements onto the lane axis (lane-dense).
    if Bf == 1:
        x = x_ref[0].astype(jnp.float32)                       # (Cin, HW)
    else:
        x = jnp.concatenate([x_ref[b] for b in range(Bf)],
                            axis=1).astype(jnp.float32)        # (Cin, Bf*HW)

    # ---- weights/biases sliced from the single packed slab (static offsets).
    def wslice(name, nrows, ncols, col0=0):
        r0 = layout[name][0]
        return wslab_ref[r0:r0 + nrows, col0:col0 + ncols]

    w0 = wslice("w0", S, 9 * Cin)            # (S, 9*Cin)
    w12 = wslice("w12", 2 * S, S)            # (2S, S)
    wd1 = wslice("wd1", S, 9)                # (S, 9)
    wd2 = wslice("wd2", S, 9)
    wc = wslice("wc", Cc, A)                 # (Cc, A)
    b12 = wslice("bias", 2 * S, 1, col0=0)   # (2S, 1)
    b0 = wslice("bias", S, 1, col0=1)
    bd1 = wslice("bias", S, 1, col0=2)
    bd2 = wslice("bias", S, 1, col0=3)
    bc = wslice("bias", Cc, 1, col0=4)

    # ---- boundary masks for the 3x3 stencils, computed ONCE (per-image via % HW
    # so cross-image roll leakage is zeroed when Bf > 1).
    li = jax.lax.broadcasted_iota(jnp.int32, (1, L), 1)
    lim = li % HW                       # position within image
    colw = lim % W
    valid_hm = lim >= W                 # reading row h-1 is in bounds
    valid_hp = lim < (H - 1) * W        # reading row h+1 is in bounds
    valid_wm = colw != 0                # reading col w-1 is in bounds
    valid_wp = colw != (W - 1)          # reading col w+1 is in bounds

    taps = [(oh, ow) for oh in (-1, 0, 1) for ow in (-1, 0, 1)]
    tap_mask = {}
    for oh, ow in taps:
        m = None
        if oh == -1:
            m = valid_hm
        elif oh == 1:
            m = valid_hp
        if ow == -1:
            m = valid_wm if m is None else jnp.logical_and(m, valid_wm)
        elif ow == 1:
            m = valid_wp if m is None else jnp.logical_and(m, valid_wp)
        tap_mask[(oh, ow)] = m

    def shifted(a, oh, ow):
        """a[:, l] -> a[:, l + oh*W + ow], zero where (h+oh, w+ow) is out of bounds."""
        s = oh * W + ow
        y = a if s == 0 else pltpu.roll(a, (-s) % L, axis=1)
        m = tap_mask[(oh, ow)]
        return y if m is None else jnp.where(m, y, 0.0)

    # ---- conv0: 3x3 dense conv (BN folded) + ReLU, as a single im2col matmul.
    patches = jnp.concatenate([shifted(x, oh, ow) for oh, ow in taps],
                              axis=0)                           # (9*Cin, L)
    x0 = jnp.maximum(
        jnp.dot(w0, patches, preferred_element_type=jnp.float32) + b0, 0.0)

    # ---- conv1 & conv2 fused into one MXU push (exact: no nonlinearity between).
    x12 = jnp.dot(w12, x0, preferred_element_type=jnp.float32) + b12   # (2S, L)
    x1 = x12[:S]
    x2 = x12[S:2 * S]

    # ---- depthwise 3x3 convs (BN folded) + ReLU, as roll-based VPU stencils.
    def dw_conv(a, wd, bd):
        acc = bd                                                 # (S, 1) lane-broadcast
        for t, (oh, ow) in enumerate(taps):
            acc = acc + shifted(a, oh, ow) * wd[:, t:t + 1]
        return jnp.maximum(acc, 0.0)

    x1n = dw_conv(x0 + x1, wd1, bd1)                             # (S, L)
    x2n = dw_conv(x1n + x2, wd2, bd2)                            # (S, L)

    # ---- channel concat + pointwise 1x1 (BN folded) + ReLU.
    # TODO(synk): the reference calls channel_shuffle(x) without the required
    # `groups` argument (a spec bug); with groups=1 the shuffle is a no-op, so
    # it is treated as identity here.
    cat = jnp.concatenate([x, x0, x1n, x2n], axis=0)             # (A, L) sublane concat
    xt = jnp.maximum(
        jnp.dot(wc, cat, preferred_element_type=jnp.float32) + bc, 0.0)   # (Cc, L)

    # ---- ESA: per-image global avg pool FIRST (pool is linear), then 3-tap
    # conv over channels on the tiny pooled column, sigmoid gate.
    k0, k1, k2 = esa_ref[0], esa_ref[1], esa_ref[2]
    pools = [jnp.mean(xt[:, b * HW:(b + 1) * HW], axis=1, keepdims=True)
             for b in range(Bf)]
    pool = pools[0] if Bf == 1 else jnp.concatenate(pools, axis=1)   # (Cc, Bf)
    ri = jax.lax.broadcasted_iota(jnp.int32, pool.shape, 0)
    p_up = jnp.where(ri >= 1, pltpu.roll(pool, 1, axis=0), 0.0)          # row c = pool[c-1]
    p_dn = jnp.where(ri <= Cc - 2, pltpu.roll(pool, Cc - 1, axis=0), 0.0)  # row c = pool[c+1]
    gate = jax.nn.sigmoid(k0 * p_up + k1 * pool + k2 * p_dn)             # (Cc, Bf)

    gate_full = gate[:, 0:1]
    for b in range(1, Bf):
        gate_full = jnp.where(li >= b * HW, gate[:, b:b + 1], gate_full)
    xt = xt * gate_full

    if identity:                        # static: in_channels == concat_channels
        xt = xt + x

    for b in range(Bf):
        out_ref[b] = xt[:, b * HW:(b + 1) * HW].astype(out_ref.dtype)


# ---------------------------------------------------------------------------
# wrapper
# ---------------------------------------------------------------------------
def _num_tensorcores():
    """1 for single-TC chips (v5e/v6e); 2 where a parallel grid maps to 2 TCs."""
    try:
        kind = jax.devices()[0].device_kind.lower()
    except Exception:
        return 1
    if ("v5 lite" in kind) or ("v5e" in kind) or ("v6" in kind):
        return 1
    if ("v4" in kind) or ("v5p" in kind) or ("7" in kind):
        return 2
    return 1


def _pack_params(params, Cin, S, Cc):
    """BN-folded params -> one lane-dense (R,128) f32 slab + (3,) ESA scalars."""
    A = params["wc"].shape[0]
    layout, nrows, ncols = _slab_layout(Cin, S, Cc, A)

    # im2col weight: rows = out channel, cols = (tap, in-channel), tap = dh*3+dw
    w0r = jnp.transpose(params["w0"].reshape(9, Cin, S), (2, 0, 1)).reshape(S, 9 * Cin)
    b0 = params["b0"].reshape(S, 1)

    # conv1/conv2 fused: x2 = W2(W1 x + b1) + b2 = (W2 W1) x + (W2 b1 + b2)
    w1k, w2k = params["w1"].T, params["w2"].T
    b1k, b2k = params["b1"].reshape(S, 1), params["b2"].reshape(S, 1)
    w12 = jnp.concatenate([w1k, w2k @ w1k], axis=0)              # (2S, S)
    b12 = jnp.concatenate([b1k, w2k @ b1k + b2k], axis=0)        # (2S, 1)

    wd1k = params["wd1"].reshape(9, S).T                         # (S, 9): column = tap
    wd2k = params["wd2"].reshape(9, S).T
    bd1 = params["bd1"].reshape(S, 1)
    bd2 = params["bd2"].reshape(S, 1)

    wck = params["wc"].T                                         # (Cc, A)
    bck = params["bc"].reshape(Cc, 1)

    slab = jnp.zeros((nrows, ncols), jnp.float32)

    def put(s, name, arr, col0=0):
        r0 = layout[name][0]
        return s.at[r0:r0 + arr.shape[0], col0:col0 + arr.shape[1]].set(
            arr.astype(jnp.float32))

    slab = put(slab, "w0", w0r)
    slab = put(slab, "w12", w12)
    slab = put(slab, "wd1", wd1k)
    slab = put(slab, "wd2", wd2k)
    slab = put(slab, "wc", wck)
    slab = put(slab, "bias", b12, col0=0)
    slab = put(slab, "bias", b0, col0=1)
    slab = put(slab, "bias", bd1, col0=2)
    slab = put(slab, "bias", bd2, col0=3)
    slab = put(slab, "bias", bck, col0=4)

    esa = params["esa_k"].astype(jnp.float32)                    # (3,) -> SMEM scalars
    return slab, esa, layout, A


def osa_forward(x_nchw, params, identity):
    B, Cin, H, W = x_nchw.shape
    S = params["w1"].shape[0]
    Cc = params["wc"].shape[1]
    HW = H * W

    slab, esa, layout, A = _pack_params(params, Cin, S, Cc)

    # Generation-aware batching: fold batch into lanes per TensorCore.
    num_tc = _num_tensorcores()
    n_grid = num_tc if (B % num_tc == 0 and num_tc <= B) else B
    Bf = B // n_grid

    # NCHW -> (B, C, H*W) is a pure reshape: channels on sublanes, flattened
    # spatial on lanes (lane-dense: HW = 256 -> unmasked 128-lane vst).
    x = x_nchw.reshape(B, Cin, HW)

    kernel = functools.partial(_osa_kernel, identity, H, W, Cin, S, Cc, A, Bf, layout)

    out = pl.pallas_call(
        kernel,
        out_shape=jax.ShapeDtypeStruct((B, Cc, HW), x.dtype),
        grid=(n_grid,),
        in_specs=[
            pl.BlockSpec((Bf, Cin, HW), lambda g: (g, 0, 0)),
            pl.BlockSpec(slab.shape, lambda g: (0, 0)),          # packed weights, resident
            pl.BlockSpec(memory_space=pltpu.MemorySpace.SMEM),   # ESA 3-tap scalars
        ],
        out_specs=pl.BlockSpec((Bf, Cc, HW), lambda g: (g, 0, 0)),
        compiler_params=pltpu.CompilerParams(
            dimension_semantics=("parallel",)),   # batch/core axis is independent
    )(x, slab, esa)

    # TODO(synk): for production-sized H/W/C add a halo'd spatial grid axis and
    # an explicit vmem_limit_bytes (v7x: 64 MiB physical / 32 MiB scoped VMEM).
    return out.reshape(B, Cc, H, W)               # still NCHW, no transpose needed


# ---------------------------------------------------------------------------
# deterministic parameter construction (BN folded into convs)
# ---------------------------------------------------------------------------
def make_params(key, in_channels, stage_channels, concat_channels,
                layer_per_block=3):
    A = in_channels + layer_per_block * stage_channels
    keys = iter(jax.random.split(key, 32))

    def nrm(shape, scale=0.1):
        return jax.random.normal(next(keys), shape, jnp.float32) * scale

    def bn_fold(c):
        gamma = 1.0 + 0.1 * jax.random.normal(next(keys), (c,), jnp.float32)
        beta = 0.1 * jax.random.normal(next(keys), (c,), jnp.float32)
        mean = 0.1 * jax.random.normal(next(keys), (c,), jnp.float32)
        var = 0.5 + 0.2 * jnp.abs(jax.random.normal(next(keys), (c,), jnp.float32))
        scale = gamma / jnp.sqrt(var + _BN_EPS)
        return scale, beta - mean * scale

    S, Cc = stage_channels, concat_channels

    # conv0: Conv2d(Cin,S,3,pad=1,bias=False) + BN + ReLU
    w0 = nrm((3, 3, in_channels, S))
    s, b = bn_fold(S)
    w0 = w0 * s
    b0 = b.reshape(1, S)

    # conv1 / conv2: Conv2d(S,S,1,bias=True)
    w1, b1 = nrm((S, S)), nrm((1, S))
    w2, b2 = nrm((S, S)), nrm((1, S))

    # conv11 / conv22: depthwise Conv2d(S,S,3,groups=S,bias=False) + BN + ReLU
    wd1 = nrm((3, 3, 1, S)); s, b = bn_fold(S); wd1 = wd1 * s; bd1 = b.reshape(1, S)
    wd2 = nrm((3, 3, 1, S)); s, b = bn_fold(S); wd2 = wd2 * s; bd2 = b.reshape(1, S)

    # concat: Conv2d(A,Cc,1,bias=True) + BN + ReLU
    wc = nrm((A, Cc))
    bconv = nrm((Cc,))
    s, b = bn_fold(Cc)
    wc = wc * s
    bc = (bconv * s + b).reshape(1, Cc)

    # ESA: Conv2d(1,1,3,pad=1,bias=False) applied on a (C,1) spatial map ->
    # only the middle kernel column contributes -> 1D 3-tap conv over channels.
    kker = nrm((3, 3))
    esa_k = jnp.stack([kker[0, 1], kker[1, 1], kker[2, 1]]).astype(jnp.float32)

    return {"w0": w0, "b0": b0, "w1": w1, "b1": b1, "w2": w2, "b2": b2,
            "wd1": wd1, "bd1": bd1, "wd2": wd2, "bd2": bd2,
            "wc": wc, "bc": bc, "esa_k": esa_k}


# ---------------------------------------------------------------------------
# pure-JAX reference (for a correctness sanity check)
# ---------------------------------------------------------------------------
def _ref_forward(x_nchw, p, identity):
    x = jnp.transpose(x_nchw, (0, 2, 3, 1))
    Cc = p["wc"].shape[1]

    def conv3(inp, w):
        return jax.lax.conv_general_dilated(
            inp, w, (1, 1), ((1, 1), (1, 1)),
            dimension_numbers=("NHWC", "HWIO", "NHWC"))

    def dwconv3(inp, w):
        return jax.lax.conv_general_dilated(
            inp, w, (1, 1), ((1, 1), (1, 1)),
            dimension_numbers=("NHWC", "HWIO", "NHWC"),
            feature_group_count=inp.shape[-1])

    x0 = jax.nn.relu(conv3(x, p["w0"]) + p["b0"])
    x1 = jnp.einsum("bhwc,co->bhwo", x0, p["w1"]) + p["b1"]
    x2 = jnp.einsum("bhwc,co->bhwo", x1, p["w2"]) + p["b2"]
    x1n = jax.nn.relu(dwconv3(x0 + x1, p["wd1"]) + p["bd1"])
    x2n = jax.nn.relu(dwconv3(x1n + x2, p["wd2"]) + p["bd2"])
    cat = jnp.concatenate([x, x0, x1n, x2n], axis=-1)
    xt = jax.nn.relu(jnp.einsum("bhwc,co->bhwo", cat, p["wc"]) + p["bc"])
    pool = jnp.mean(xt, axis=(1, 2))
    k = p["esa_k"]
    M = (k[0] * jnp.eye(Cc, k=1) + k[1] * jnp.eye(Cc, k=0)
         + k[2] * jnp.eye(Cc, k=-1)).astype(jnp.float32)
    gate = jax.nn.sigmoid(pool @ M)
    xt = xt * gate[:, None, None, :]
    if identity:
        xt = xt + x
    return jnp.transpose(xt, (0, 3, 1, 2))


if __name__ == "__main__":
    # Module config (small): in=8, stage=8, concat=8 -> identity branch active.
    B, Cin, H, W = 2, 8, 16, 16
    stage_channels, concat_channels, layer_per_block = 8, 8, 3
    identity = (Cin == concat_channels)

    key = jax.random.PRNGKey(0)
    kx, kp = jax.random.split(key)
    x = jax.random.normal(kx, (B, Cin, H, W), jnp.float32)   # NCHW like PyTorch
    params = make_params(kp, Cin, stage_channels, concat_channels, layer_per_block)

    out = jax.block_until_ready(osa_forward(x, params, identity))

    ref = jax.block_until_ready(_ref_forward(x, params, identity))
    assert out.shape == (B, concat_channels, H, W)
    assert jnp.allclose(out, ref, atol=2e-4, rtol=2e-4), "mismatch vs JAX reference"

    print("KERNEL_OK")
</pallas_src>

<mosaic_0001>
module attributes {stable_mosaic.version = 11 : i64} {
  func.func @_osa_kernel(%arg0: i32, %arg1: memref<2x8x256xf32, #tpu.memory_space<vmem>>, %arg2: memref<64x128xf32, #tpu.memory_space<vmem>>, %arg3: memref<3xf32, #tpu.memory_space<smem>>, %arg4: memref<2x8x256xf32, #tpu.memory_space<vmem>>) attributes {dimension_semantics = [#tpu.dimension_semantics<parallel>], iteration_bounds = array<i64: 1>, scalar_prefetch = 0 : i64, scratch_operands = 0 : i64, tpu.core_type = #tpu.core_type<tc>, window_params = [{transform_indices = @transform_0, window_bounds = array<i64: 2, 8, 256>}, {pipeline_mode = #tpu.pipeline_mode<synchronous>, transform_indices = @transform_1, window_bounds = array<i64: 64, 128>}, {transform_indices = @transform_2, window_bounds = array<i64: 3>}, {transform_indices = @transform_3, window_bounds = array<i64: 2, 8, 256>}]} {
    %c0 = arith.constant 0 : index
    %c0_0 = arith.constant 0 : index
    %c0_1 = arith.constant 0 : index
    %0 = vector.load %arg1[%c0, %c0_0, %c0_1] : memref<2x8x256xf32, #tpu.memory_space<vmem>>, vector<1x8x256xf32>
    %1 = vector.shape_cast %0 : vector<1x8x256xf32> to vector<8x256xf32>
    %c1 = arith.constant 1 : index
    %c0_2 = arith.constant 0 : index
    %c0_3 = arith.constant 0 : index
    %2 = vector.load %arg1[%c1, %c0_2, %c0_3] : memref<2x8x256xf32, #tpu.memory_space<vmem>>, vector<1x8x256xf32>
    %3 = vector.shape_cast %2 : vector<1x8x256xf32> to vector<8x256xf32>
    %4 = tpu.concatenate %1, %3 in 1 : vector<8x256xf32>, vector<8x256xf32> -> vector<8x512xf32>
    %c0_4 = arith.constant 0 : index
    %c0_5 = arith.constant 0 : index
    %5 = vector.load %arg2[%c0_4, %c0_5] : memref<64x128xf32, #tpu.memory_space<vmem>>, vector<8x72xf32>
    %c8 = arith.constant 8 : index
    %c0_6 = arith.constant 0 : index
    %6 = vector.load %arg2[%c8, %c0_6] : memref<64x128xf32, #tpu.memory_space<vmem>>, vector<16x8xf32>
    %c24 = arith.constant 24 : index
    %c0_7 = arith.constant 0 : index
    %7 = vector.load %arg2[%c24, %c0_7] : memref<64x128xf32, #tpu.memory_space<vmem>>, vector<8x9xf32>
    %c32 = arith.constant 32 : index
    %c0_8 = arith.constant 0 : index
    %8 = vector.load %arg2[%c32, %c0_8] : memref<64x128xf32, #tpu.memory_space<vmem>>, vector<8x9xf32>
    %c40 = arith.constant 40 : index
    %c0_9 = arith.constant 0 : index
    %9 = vector.load %arg2[%c40, %c0_9] : memref<64x128xf32, #tpu.memory_space<vmem>>, vector<8x32xf32>
    %c48 = arith.constant 48 : index
    %c0_10 = arith.constant 0 : index
    %10 = vector.load %arg2[%c48, %c0_10] : memref<64x128xf32, #tpu.memory_space<vmem>>, vector<16x1xf32>
    %c48_11 = arith.constant 48 : index
    %c1_12 = arith.constant 1 : index
    %11 = vector.load %arg2[%c48_11, %c1_12] : memref<64x128xf32, #tpu.memory_space<vmem>>, vector<8x1xf32>
    %c48_13 = arith.constant 48 : index
    %c2 = arith.constant 2 : index
    %12 = vector.load %arg2[%c48_13, %c2] : memref<64x128xf32, #tpu.memory_space<vmem>>, vector<8x1xf32>
    %c48_14 = arith.constant 48 : index
    %c3 = arith.constant 3 : index
    %13 = vector.load %arg2[%c48_14, %c3] : memref<64x128xf32, #tpu.memory_space<vmem>>, vector<8x1xf32>
    %c48_15 = arith.constant 48 : index
    %c4 = arith.constant 4 : index
    %14 = vector.load %arg2[%c48_15, %c4] : memref<64x128xf32, #tpu.memory_space<vmem>>, vector<8x1xf32>
    %15 = tpu.iota {dimensions = array<i32: 1>} : vector<1x512xi32>
    %c256_i32 = arith.constant 256 : i32
    %c0_i32 = arith.constant 0 : i32
    %16 = arith.cmpi eq, %c256_i32, %c0_i32 : i32
    %c1_i32 = arith.constant 1 : i32
    %17 = arith.select %16, %c1_i32, %c256_i32 : i32
    %18 = vector.broadcast %17 : i32 to vector<1x512xi32>
    %19 = arith.remsi %15, %18 : vector<1x512xi32>
    %c0_i32_16 = arith.constant 0 : i32
    %20 = vector.broadcast %c0_i32_16 : i32 to vector<1x512xi32>
    %21 = arith.cmpi ne, %19, %20 : vector<1x512xi32>
    %c0_i32_17 = arith.constant 0 : i32
    %22 = vector.broadcast %c0_i32_17 : i32 to vector<1x512xi32>
    %23 = arith.cmpi slt, %19, %22 : vector<1x512xi32>
    %c0_i32_18 = arith.constant 0 : i32
    %24 = arith.cmpi slt, %17, %c0_i32_18 : i32
    %25 = vector.broadcast %24 : i1 to vector<1x512xi1>
    %26 = vector.broadcast %25 : vector<1x512xi1> to vector<1x512xi1>
    %27 = arith.xori %23, %26 : vector<1x512xi1>
    %28 = arith.andi %27, %21 : vector<1x512xi1>
    %29 = vector.broadcast %17 : i32 to vector<1x512xi32>
    %30 = arith.addi %19, %29 : vector<1x512xi32>
    %31 = arith.select %28, %30, %19 : vector<1x512xi1>, vector<1x512xi32>
    %c16_i32 = arith.constant 16 : i32
    %c0_i32_19 = arith.constant 0 : i32
    %32 = arith.cmpi eq, %c16_i32, %c0_i32_19 : i32
    %c1_i32_20 = arith.constant 1 : i32
    %33 = arith.select %32, %c1_i32_20, %c16_i32 : i32
    %34 = vector.broadcast %33 : i32 to vector<1x512xi32>
    %35 = arith.remsi %31, %34 : vector<1x512xi32>
    %c0_i32_21 = arith.constant 0 : i32
    %36 = vector.broadcast %c0_i32_21 : i32 to vector<1x512xi32>
    %37 = arith.cmpi ne, %35, %36 : vector<1x512xi32>
    %c0_i32_22 = arith.constant 0 : i32
    %38 = vector.broadcast %c0_i32_22 : i32 to vector<1x512xi32>
    %39 = arith.cmpi slt, %35, %38 : vector<1x512xi32>
    %c0_i32_23 = arith.constant 0 : i32
    %40 = arith.cmpi slt, %33, %c0_i32_23 : i32
    %41 = vector.broadcast %40 : i1 to vector<1x512xi1>
    %42 = vector.broadcast %41 : vector<1x512xi1> to vector<1x512xi1>
    %43 = arith.xori %39, %42 : vector<1x512xi1>
    %44 = arith.andi %43, %37 : vector<1x512xi1>
    %45 = vector.broadcast %33 : i32 to vector<1x512xi32>
    %46 = arith.addi %35, %45 : vector<1x512xi32>
    %47 = arith.select %44, %46, %35 : vector<1x512xi1>, vector<1x512xi32>
    %c16_i32_24 = arith.constant 16 : i32
    %48 = vector.broadcast %c16_i32_24 : i32 to vector<1x512xi32>
    %49 = arith.cmpi sge, %31, %48 : vector<1x512xi32>
    %c240_i32 = arith.constant 240 : i32
    %50 = vector.broadcast %c240_i32 : i32 to vector<1x512xi32>
    %51 = arith.cmpi slt, %31, %50 : vector<1x512xi32>
    %c0_i32_25 = arith.constant 0 : i32
    %52 = vector.broadcast %c0_i32_25 : i32 to vector<1x512xi32>
    %53 = arith.cmpi ne, %47, %52 : vector<1x512xi32>
    %c15_i32 = arith.constant 15 : i32
    %54 = vector.broadcast %c15_i32 : i32 to vector<1x512xi32>
    %55 = arith.cmpi ne, %47, %54 : vector<1x512xi32>
    %56 = arith.andi %49, %53 : vector<1x512xi1>
    %57 = arith.andi %49, %55 : vector<1x512xi1>
    %58 = arith.andi %51, %53 : vector<1x512xi1>
    %59 = arith.andi %51, %55 : vector<1x512xi1>
    %c17_i32 = arith.constant 17 : i32
    %60 = tpu.dynamic_rotate %4 by %c17_i32 dim 1 : vector<8x512xf32>, i32 -> vector<8x512xf32>
    %cst = arith.constant 0.000000e+00 : f32
    %61 = vector.shape_cast %56 : vector<1x512xi1> to vector<1x512xi1>
    %62 = vector.broadcast %61 : vector<1x512xi1> to vector<8x512xi1>
    %63 = vector.broadcast %cst : f32 to vector<8x512xf32>
    %64 = arith.select %62, %60, %63 : vector<8x512xi1>, vector<8x512xf32>
    %c16_i32_26 = arith.constant 16 : i32
    %65 = tpu.dynamic_rotate %4 by %c16_i32_26 dim 1 : vector<8x512xf32>, i32 -> vector<8x512xf32>
    %cst_27 = arith.constant 0.000000e+00 : f32
    %66 = vector.shape_cast %49 : vector<1x512xi1> to vector<1x512xi1>
    %67 = vector.broadcast %66 : vector<1x512xi1> to vector<8x512xi1>
    %68 = vector.broadcast %cst_27 : f32 to vector<8x512xf32>
    %69 = arith.select %67, %65, %68 : vector<8x512xi1>, vector<8x512xf32>
    %c15_i32_28 = arith.constant 15 : i32
    %70 = tpu.dynamic_rotate %4 by %c15_i32_28 dim 1 : vector<8x512xf32>, i32 -> vector<8x512xf32>
    %cst_29 = arith.constant 0.000000e+00 : f32
    %71 = vector.shape_cast %57 : vector<1x512xi1> to vector<1x512xi1>
    %72 = vector.broadcast %71 : vector<1x512xi1> to vector<8x512xi1>
    %73 = vector.broadcast %cst_29 : f32 to vector<8x512xf32>
    %74 = arith.select %72, %70, %73 : vector<8x512xi1>, vector<8x512xf32>
    %c1_i32_30 = arith.constant 1 : i32
    %75 = tpu.dynamic_rotate %4 by %c1_i32_30 dim 1 : vector<8x512xf32>, i32 -> vector<8x512xf32>
    %cst_31 = arith.constant 0.000000e+00 : f32
    %76 = vector.shape_cast %53 : vector<1x512xi1> to vector<1x512xi1>
    %77 = vector.broadcast %76 : vector<1x512xi1> to vector<8x512xi1>
    %78 = vector.broadcast %cst_31 : f32 to vector<8x512xf32>
    %79 = arith.select %77, %75, %78 : vector<8x512xi1>, vector<8x512xf32>
    %c511_i32 = arith.constant 511 : i32
    %80 = tpu.dynamic_rotate %4 by %c511_i32 dim 1 : vector<8x512xf32>, i32 -> vector<8x512xf32>
    %cst_32 = arith.constant 0.000000e+00 : f32
    %81 = vector.shape_cast %55 : vector<1x512xi1> to vector<1x512xi1>
    %82 = vector.broadcast %81 : vector<1x512xi1> to vector<8x512xi1>
    %83 = vector.broadcast %cst_32 : f32 to vector<8x512xf32>
    %84 = arith.select %82, %80, %83 : vector<8x512xi1>, vector<8x512xf32>
    %c497_i32 = arith.constant 497 : i32
    %85 = tpu.dynamic_rotate %4 by %c497_i32 dim 1 : vector<8x512xf32>, i32 -> vector<8x512xf32>
    %cst_33 = arith.constant 0.000000e+00 : f32
    %86 = vector.shape_cast %58 : vector<1x512xi1> to vector<1x512xi1>
    %87 = vector.broadcast %86 : vector<1x512xi1> to vector<8x512xi1>
    %88 = vector.broadcast %cst_33 : f32 to vector<8x512xf32>
    %89 = arith.select %87, %85, %88 : vector<8x512xi1>, vector<8x512xf32>
    %c496_i32 = arith.constant 496 : i32
    %90 = tpu.dynamic_rotate %4 by %c496_i32 dim 1 : vector<8x512xf32>, i32 -> vector<8x512xf32>
    %cst_34 = arith.constant 0.000000e+00 : f32
    %91 = vector.shape_cast %51 : vector<1x512xi1> to vector<1x512xi1>
    %92 = vector.broadcast %91 : vector<1x512xi1> to vector<8x512xi1>
    %93 = vector.broadcast %cst_34 : f32 to vector<8x512xf32>
    %94 = arith.select %92, %90, %93 : vector<8x512xi1>, vector<8x512xf32>
    %c495_i32 = arith.constant 495 : i32
    %95 = tpu.dynamic_rotate %4 by %c495_i32 dim 1 : vector<8x512xf32>, i32 -> vector<8x512xf32>
    %cst_35 = arith.constant 0.000000e+00 : f32
    %96 = vector.shape_cast %59 : vector<1x512xi1> to vector<1x512xi1>
    %97 = vector.broadcast %96 : vector<1x512xi1> to vector<8x512xi1>
    %98 = vector.broadcast %cst_35 : f32 to vector<8x512xf32>
    %99 = arith.select %97, %95, %98 : vector<8x512xi1>, vector<8x512xf32>
    %100 = tpu.concatenate %64, %69, %74, %79, %4, %84, %89, %94, %99 in 0 : vector<8x512xf32>, vector<8x512xf32>, vector<8x512xf32>, vector<8x512xf32>, vector<8x512xf32>, vector<8x512xf32>, vector<8x512xf32>, vector<8x512xf32>, vector<8x512xf32> -> vector<72x512xf32>
    %cst_36 = arith.constant dense<0.000000e+00> : vector<8x512xf32>
    %101 = tpu.matmul %5, %100, %cst_36 {dimension_numbers = #tpu.dot_dimension_numbers<[1], [0], [0], [1], [0, 0, 1, 1], [], []>} : vector<8x72xf32>, vector<72x512xf32>, vector<8x512xf32> -> vector<8x512xf32>
    %102 = vector.broadcast %11 : vector<8x1xf32> to vector<8x512xf32>
    %103 = arith.addf %101, %102 : vector<8x512xf32>
    %cst_37 = arith.constant 0.000000e+00 : f32
    %104 = vector.broadcast %cst_37 : f32 to vector<8x512xf32>
    %105 = arith.maximumf %103, %104 : vector<8x512xf32>
    %cst_38 = arith.constant dense<0.000000e+00> : vector<16x512xf32>
    %106 = tpu.matmul %6, %105, %cst_38 {dimension_numbers = #tpu.dot_dimension_numbers<[1], [0], [0], [1], [0, 0, 1, 1], [], []>} : vector<16x8xf32>, vector<8x512xf32>, vector<16x512xf32> -> vector<16x512xf32>
    %107 = vector.broadcast %10 : vector<16x1xf32> to vector<16x512xf32>
    %108 = arith.addf %106, %107 : vector<16x512xf32>
    %109 = vector.extract_strided_slice %108 {offsets = [0, 0], sizes = [8, 512], strides = [1, 1]} : vector<16x512xf32> to vector<8x512xf32>
    %110 = vector.extract_strided_slice %108 {offsets = [8, 0], sizes = [8, 512], strides = [1, 1]} : vector<16x512xf32> to vector<8x512xf32>
    %111 = arith.addf %105, %109 : vector<8x512xf32>
    %c17_i32_39 = arith.constant 17 : i32
    %112 = tpu.dynamic_rotate %111 by %c17_i32_39 dim 1 : vector<8x512xf32>, i32 -> vector<8x512xf32>
    %cst_40 = arith.constant 0.000000e+00 : f32
    %113 = vector.shape_cast %56 : vector<1x512xi1> to vector<1x512xi1>
    %114 = vector.broadcast %113 : vector<1x512xi1> to vector<8x512xi1>
    %115 = vector.broadcast %cst_40 : f32 to vector<8x512xf32>
    %116 = arith.select %114, %112, %115 : vector<8x512xi1>, vector<8x512xf32>
    %117 = vector.extract_strided_slice %7 {offsets = [0, 0], sizes = [8, 1], strides = [1, 1]} : vector<8x9xf32> to vector<8x1xf32>
    %118 = vector.broadcast %117 : vector<8x1xf32> to vector<8x512xf32>
    %119 = arith.mulf %116, %118 : vector<8x512xf32>
    %120 = vector.broadcast %12 : vector<8x1xf32> to vector<8x512xf32>
    %121 = arith.addf %120, %119 : vector<8x512xf32>
    %c16_i32_41 = arith.constant 16 : i32
    %122 = tpu.dynamic_rotate %111 by %c16_i32_41 dim 1 : vector<8x512xf32>, i32 -> vector<8x512xf32>
    %cst_42 = arith.constant 0.000000e+00 : f32
    %123 = vector.shape_cast %49 : vector<1x512xi1> to vector<1x512xi1>
    %124 = vector.broadcast %123 : vector<1x512xi1> to vector<8x512xi1>
    %125 = vector.broadcast %cst_42 : f32 to vector<8x512xf32>
    %126 = arith.select %124, %122, %125 : vector<8x512xi1>, vector<8x512xf32>
    %127 = vector.extract_strided_slice %7 {offsets = [0, 1], sizes = [8, 1], strides = [1, 1]} : vector<8x9xf32> to vector<8x1xf32>
    %128 = vector.broadcast %127 : vector<8x1xf32> to vector<8x512xf32>
    %129 = arith.mulf %126, %128 : vector<8x512xf32>
    %130 = arith.addf %121, %129 : vector<8x512xf32>
    %c15_i32_43 = arith.constant 15 : i32
    %131 = tpu.dynamic_rotate %111 by %c15_i32_43 dim 1 : vector<8x512xf32>, i32 -> vector<8x512xf32>
    %cst_44 = arith.constant 0.000000e+00 : f32
    %132 = vector.shape_cast %57 : vector<1x512xi1> to vector<1x512xi1>
    %133 = vector.broadcast %132 : vector<1x512xi1> to vector<8x512xi1>
    %134 = vector.broadcast %cst_44 : f32 to vector<8x512xf32>
    %135 = arith.select %133, %131, %134 : vector<8x512xi1>, vector<8x512xf32>
    %136 = vector.extract_strided_slice %7 {offsets = [0, 2], sizes = [8, 1], strides = [1, 1]} : vector<8x9xf32> to vector<8x1xf32>
    %137 = vector.broadcast %136 : vector<8x1xf32> to vector<8x512xf32>
    %138 = arith.mulf %135, %137 : vector<8x512xf32>
    %139 = arith.addf %130, %138 : vector<8x512xf32>
    %c1_i32_45 = arith.constant 1 : i32
    %140 = tpu.dynamic_rotate %111 by %c1_i32_45 dim 1 : vector<8x512xf32>, i32 -> vector<8x512xf32>
    %cst_46 = arith.constant 0.000000e+00 : f32
    %141 = vector.shape_cast %53 : vector<1x512xi1> to vector<1x512xi1>
    %142 = vector.broadcast %141 : vector<1x512xi1> to vector<8x512xi1>
    %143 = vector.broadcast %cst_46 : f32 to vector<8x512xf32>
    %144 = arith.select %142, %140, %143 : vector<8x512xi1>, vector<8x512xf32>
    %145 = vector.extract_strided_slice %7 {offsets = [0, 3], sizes = [8, 1], strides = [1, 1]} : vector<8x9xf32> to vector<8x1xf32>
    %146 = vector.broadcast %145 : vector<8x1xf32> to vector<8x512xf32>
    %147 = arith.mulf %144, %146 : vector<8x512xf32>
    %148 = arith.addf %139, %147 : vector<8x512xf32>
    %149 = vector.extract_strided_slice %7 {offsets = [0, 4], sizes = [8, 1], strides = [1, 1]} : vector<8x9xf32> to vector<8x1xf32>
    %150 = vector.broadcast %149 : vector<8x1xf32> to vector<8x512xf32>
    %151 = arith.mulf %111, %150 : vector<8x512xf32>
    %152 = arith.addf %148, %151 : vector<8x512xf32>
    %c511_i32_47 = arith.constant 511 : i32
    %153 = tpu.dynamic_rotate %111 by %c511_i32_47 dim 1 : vector<8x512xf32>, i32 -> vector<8x512xf32>
    %cst_48 = arith.constant 0.000000e+00 : f32
    %154 = vector.shape_cast %55 : vector<1x512xi1> to vector<1x512xi1>
    %155 = vector.broadcast %154 : vector<1x512xi1> to vector<8x512xi1>
    %156 = vector.broadcast %cst_48 : f32 to vector<8x512xf32>
    %157 = arith.select %155, %153, %156 : vector<8x512xi1>, vector<8x512xf32>
    %158 = vector.extract_strided_slice %7 {offsets = [0, 5], sizes = [8, 1], strides = [1, 1]} : vector<8x9xf32> to vector<8x1xf32>
    %159 = vector.broadcast %158 : vector<8x1xf32> to vector<8x512xf32>
    %160 = arith.mulf %157, %159 : vector<8x512xf32>
    %161 = arith.addf %152, %160 : vector<8x512xf32>
    %c497_i32_49 = arith.constant 497 : i32
    %162 = tpu.dynamic_rotate %111 by %c497_i32_49 dim 1 : vector<8x512xf32>, i32 -> vector<8x512xf32>
    %cst_50 = arith.constant 0.000000e+00 : f32
    %163 = vector.shape_cast %58 : vector<1x512xi1> to vector<1x512xi1>
    %164 = vector.broadcast %163 : vector<1x512xi1> to vector<8x512xi1>
    %165 = vector.broadcast %cst_50 : f32 to vector<8x512xf32>
    %166 = arith.select %164, %162, %165 : vector<8x512xi1>, vector<8x512xf32>
    %167 = vector.extract_strided_slice %7 {offsets = [0, 6], sizes = [8, 1], strides = [1, 1]} : vector<8x9xf32> to vector<8x1xf32>
    %168 = vector.broadcast %167 : vector<8x1xf32> to vector<8x512xf32>
    %169 = arith.mulf %166, %168 : vector<8x512xf32>
    %170 = arith.addf %161, %169 : vector<8x512xf32>
    %c496_i32_51 = arith.constant 496 : i32
    %171 = tpu.dynamic_rotate %111 by %c496_i32_51 dim 1 : vector<8x512xf32>, i32 -> vector<8x512xf32>
    %cst_52 = arith.constant 0.000000e+00 : f32
    %172 = vector.shape_cast %51 : vector<1x512xi1> to vector<1x512xi1>
    %173 = vector.broadcast %172 : vector<1x512xi1> to vector<8x512xi1>
    %174 = vector.broadcast %cst_52 : f32 to vector<8x512xf32>
    %175 = arith.select %173, %171, %174 : vector<8x512xi1>, vector<8x512xf32>
    %176 = vector.extract_strided_slice %7 {offsets = [0, 7], sizes = [8, 1], strides = [1, 1]} : vector<8x9xf32> to vector<8x1xf32>
    %177 = vector.broadcast %176 : vector<8x1xf32> to vector<8x512xf32>
    %178 = arith.mulf %175, %177 : vector<8x512xf32>
    %179 = arith.addf %170, %178 : vector<8x512xf32>
    %c495_i32_53 = arith.constant 495 : i32
    %180 = tpu.dynamic_rotate %111 by %c495_i32_53 dim 1 : vector<8x512xf32>, i32 -> vector<8x512xf32>
    %cst_54 = arith.constant 0.000000e+00 : f32
    %181 = vector.shape_cast %59 : vector<1x512xi1> to vector<1x512xi1>
    %182 = vector.broadcast %181 : vector<1x512xi1> to vector<8x512xi1>
    %183 = vector.broadcast %cst_54 : f32 to vector<8x512xf32>
    %184 = arith.select %182, %180, %183 : vector<8x512xi1>, vector<8x512xf32>
    %185 = vector.extract_strided_slice %7 {offsets = [0, 8], sizes = [8, 1], strides = [1, 1]} : vector<8x9xf32> to vector<8x1xf32>
    %186 = vector.broadcast %185 : vector<8x1xf32> to vector<8x512xf32>
    %187 = arith.mulf %184, %186 : vector<8x512xf32>
    %188 = arith.addf %179, %187 : vector<8x512xf32>
    %cst_55 = arith.constant 0.000000e+00 : f32
    %189 = vector.broadcast %cst_55 : f32 to vector<8x512xf32>
    %190 = arith.maximumf %188, %189 : vector<8x512xf32>
    %191 = arith.addf %190, %110 : vector<8x512xf32>
    %c17_i32_56 = arith.constant 17 : i32
    %192 = tpu.dynamic_rotate %191 by %c17_i32_56 dim 1 : vector<8x512xf32>, i32 -> vector<8x512xf32>
    %cst_57 = arith.constant 0.000000e+00 : f32
    %193 = vector.shape_cast %56 : vector<1x512xi1> to vector<1x512xi1>
    %194 = vector.broadcast %193 : vector<1x512xi1> to vector<8x512xi1>
    %195 = vector.broadcast %cst_57 : f32 to vector<8x512xf32>
    %196 = arith.select %194, %192, %195 : vector<8x512xi1>, vector<8x512xf32>
    %197 = vector.extract_strided_slice %8 {offsets = [0, 0], sizes = [8, 1], strides = [1, 1]} : vector<8x9xf32> to vector<8x1xf32>
    %198 = vector.broadcast %197 : vector<8x1xf32> to vector<8x512xf32>
    %199 = arith.mulf %196, %198 : vector<8x512xf32>
    %200 = vector.broadcast %13 : vector<8x1xf32> to vector<8x512xf32>
    %201 = arith.addf %200, %199 : vector<8x512xf32>
    %c16_i32_58 = arith.constant 16 : i32
    %202 = tpu.dynamic_rotate %191 by %c16_i32_58 dim 1 : vector<8x512xf32>, i32 -> vector<8x512xf32>
    %cst_59 = arith.constant 0.000000e+00 : f32
    %203 = vector.shape_cast %49 : vector<1x512xi1> to vector<1x512xi1>
    %204 = vector.broadcast %203 : vector<1x512xi1> to vector<8x512xi1>
    %205 = vector.broadcast %cst_59 : f32 to vector<8x512xf32>
    %206 = arith.select %204, %202, %205 : vector<8x512xi1>, vector<8x512xf32>
    %207 = vector.extract_strided_slice %8 {offsets = [0, 1], sizes = [8, 1], strides = [1, 1]} : vector<8x9xf32> to vector<8x1xf32>
    %208 = vector.broadcast %207 : vector<8x1xf32> to vector<8x512xf32>
    %209 = arith.mulf %206, %208 : vector<8x512xf32>
    %210 = arith.addf %201, %209 : vector<8x512xf32>
    %c15_i32_60 = arith.constant 15 : i32
    %211 = tpu.dynamic_rotate %191 by %c15_i32_60 dim 1 : vector<8x512xf32>, i32 -> vector<8x512xf32>
    %cst_61 = arith.constant 0.000000e+00 : f32
    %212 = vector.shape_cast %57 : vector<1x512xi1> to vector<1x512xi1>
    %213 = vector.broadcast %212 : vector<1x512xi1> to vector<8x512xi1>
    %214 = vector.broadcast %cst_61 : f32 to vector<8x512xf32>
    %215 = arith.select %213, %211, %214 : vector<8x512xi1>, vector<8x512xf32>
    %216 = vector.extract_strided_slice %8 {offsets = [0, 2], sizes = [8, 1], strides = [1, 1]} : vector<8x9xf32> to vector<8x1xf32>
    %217 = vector.broadcast %216 : vector<8x1xf32> to vector<8x512xf32>
    %218 = arith.mulf %215, %217 : vector<8x512xf32>
    %219 = arith.addf %210, %218 : vector<8x512xf32>
    %c1_i32_62 = arith.constant 1 : i32
    %220 = tpu.dynamic_rotate %191 by %c1_i32_62 dim 1 : vector<8x512xf32>, i32 -> vector<8x512xf32>
    %cst_63 = arith.constant 0.000000e+00 : f32
    %221 = vector.shape_cast %53 : vector<1x512xi1> to vector<1x512xi1>
    %222 = vector.broadcast %221 : vector<1x512xi1> to vector<8x512xi1>
    %223 = vector.broadcast %cst_63 : f32 to vector<8x512xf32>
    %224 = arith.select %222, %220, %223 : vector<8x512xi1>, vector<8x512xf32>
    %225 = vector.extract_strided_slice %8 {offsets = [0, 3], sizes = [8, 1], strides = [1, 1]} : vector<8x9xf32> to vector<8x1xf32>
    %226 = vector.broadcast %225 : vector<8x1xf32> to vector<8x512xf32>
    %227 = arith.mulf %224, %226 : vector<8x512xf32>
    %228 = arith.addf %219, %227 : vector<8x512xf32>
    %229 = vector.extract_strided_slice %8 {offsets = [0, 4], sizes = [8, 1], strides = [1, 1]} : vector<8x9xf32> to vector<8x1xf32>
    %230 = vector.broadcast %229 : vector<8x1xf32> to vector<8x512xf32>
    %231 = arith.mulf %191, %230 : vector<8x512xf32>
    %232 = arith.addf %228, %231 : vector<8x512xf32>
    %c511_i32_64 = arith.constant 511 : i32
    %233 = tpu.dynamic_rotate %191 by %c511_i32_64 dim 1 : vector<8x512xf32>, i32 -> vector<8x512xf32>
    %cst_65 = arith.constant 0.000000e+00 : f32
    %234 = vector.shape_cast %55 : vector<1x512xi1> to vector<1x512xi1>
    %235 = vector.broadcast %234 : vector<1x512xi1> to vector<8x512xi1>
    %236 = vector.broadcast %cst_65 : f32 to vector<8x512xf32>
    %237 = arith.select %235, %233, %236 : vector<8x512xi1>, vector<8x512xf32>
    %238 = vector.extract_strided_slice %8 {offsets = [0, 5], sizes = [8, 1], strides = [1, 1]} : vector<8x9xf32> to vector<8x1xf32>
    %239 = vector.broadcast %238 : vector<8x1xf32> to vector<8x512xf32>
    %240 = arith.mulf %237, %239 : vector<8x512xf32>
    %241 = arith.addf %232, %240 : vector<8x512xf32>
    %c497_i32_66 = arith.constant 497 : i32
    %242 = tpu.dynamic_rotate %191 by %c497_i32_66 dim 1 : vector<8x512xf32>, i32 -> vector<8x512xf32>
    %cst_67 = arith.constant 0.000000e+00 : f32
    %243 = vector.shape_cast %58 : vector<1x512xi1> to vector<1x512xi1>
    %244 = vector.broadcast %243 : vector<1x512xi1> to vector<8x512xi1>
    %245 = vector.broadcast %cst_67 : f32 to vector<8x512xf32>
    %246 = arith.select %244, %242, %245 : vector<8x512xi1>, vector<8x512xf32>
    %247 = vector.extract_strided_slice %8 {offsets = [0, 6], sizes = [8, 1], strides = [1, 1]} : vector<8x9xf32> to vector<8x1xf32>
    %248 = vector.broadcast %247 : vector<8x1xf32> to vector<8x512xf32>
    %249 = arith.mulf %246, %248 : vector<8x512xf32>
    %250 = arith.addf %241, %249 : vector<8x512xf32>
    %c496_i32_68 = arith.constant 496 : i32
    %251 = tpu.dynamic_rotate %191 by %c496_i32_68 dim 1 : vector<8x512xf32>, i32 -> vector<8x512xf32>
    %cst_69 = arith.constant 0.000000e+00 : f32
    %252 = vector.shape_cast %51 : vector<1x512xi1> to vector<1x512xi1>
    %253 = vector.broadcast %252 : vector<1x512xi1> to vector<8x512xi1>
    %254 = vector.broadcast %cst_69 : f32 to vector<8x512xf32>
    %255 = arith.select %253, %251, %254 : vector<8x512xi1>, vector<8x512xf32>
    %256 = vector.extract_strided_slice %8 {offsets = [0, 7], sizes = [8, 1], strides = [1, 1]} : vector<8x9xf32> to vector<8x1xf32>
    %257 = vector.broadcast %256 : vector<8x1xf32> to vector<8x512xf32>
    %258 = arith.mulf %255, %257 : vector<8x512xf32>
    %259 = arith.addf %250, %258 : vector<8x512xf32>
    %c495_i32_70 = arith.constant 495 : i32
    %260 = tpu.dynamic_rotate %191 by %c495_i32_70 dim 1 : vector<8x512xf32>, i32 -> vector<8x512xf32>
    %cst_71 = arith.constant 0.000000e+00 : f32
    %261 = vector.shape_cast %59 : vector<1x512xi1> to vector<1x512xi1>
    %262 = vector.broadcast %261 : vector<1x512xi1> to vector<8x512xi1>
    %263 = vector.broadcast %cst_71 : f32 to vector<8x512xf32>
    %264 = arith.select %262, %260, %263 : vector<8x512xi1>, vector<8x512xf32>
    %265 = vector.extract_strided_slice %8 {offsets = [0, 8], sizes = [8, 1], strides = [1, 1]} : vector<8x9xf32> to vector<8x1xf32>
    %266 = vector.broadcast %265 : vector<8x1xf32> to vector<8x512xf32>
    %267 = arith.mulf %264, %266 : vector<8x512xf32>
    %268 = arith.addf %259, %267 : vector<8x512xf32>
    %cst_72 = arith.constant 0.000000e+00 : f32
    %269 = vector.broadcast %cst_72 : f32 to vector<8x512xf32>
    %270 = arith.maximumf %268, %269 : vector<8x512xf32>
    %271 = tpu.concatenate %4, %105, %190, %270 in 0 : vector<8x512xf32>, vector<8x512xf32>, vector<8x512xf32>, vector<8x512xf32> -> vector<32x512xf32>
    %cst_73 = arith.constant dense<0.000000e+00> : vector<8x512xf32>
    %272 = tpu.matmul %9, %271, %cst_73 {dimension_numbers = #tpu.dot_dimension_numbers<[1], [0], [0], [1], [0, 0, 1, 1], [], []>} : vector<8x32xf32>, vector<32x512xf32>, vector<8x512xf32> -> vector<8x512xf32>
    %273 = vector.broadcast %14 : vector<8x1xf32> to vector<8x512xf32>
    %274 = arith.addf %272, %273 : vector<8x512xf32>
    %cst_74 = arith.constant 0.000000e+00 : f32
    %275 = vector.broadcast %cst_74 : f32 to vector<8x512xf32>
    %276 = arith.maximumf %274, %275 : vector<8x512xf32>
    %c0_75 = arith.constant 0 : index
    %277 = memref.load %arg3[%c0_75] : memref<3xf32, #tpu.memory_space<smem>>
    %c1_76 = arith.constant 1 : index
    %278 = memref.load %arg3[%c1_76] : memref<3xf32, #tpu.memory_space<smem>>
    %c2_77 = arith.constant 2 : index
    %279 = memref.load %arg3[%c2_77] : memref<3xf32, #tpu.memory_space<smem>>
    %280 = vector.extract_strided_slice %276 {offsets = [0, 0], sizes = [8, 256], strides = [1, 1]} : vector<8x512xf32> to vector<8x256xf32>
    %cst_78 = arith.constant dense<0.000000e+00> : vector<8xf32>
    %281 = vector.multi_reduction <add>, %280, %cst_78 [1] : vector<8x256xf32> to vector<8xf32>
    %282 = vector.shape_cast %281 : vector<8xf32> to vector<8x1xf32>
    %cst_79 = arith.constant 2.560000e+02 : f32
    %283 = vector.broadcast %cst_79 : f32 to vector<8x1xf32>
    %284 = arith.divf %282, %283 : vector<8x1xf32>
    %285 = vector.extract_strided_slice %276 {offsets = [0, 256], sizes = [8, 256], strides = [1, 1]} : vector<8x512xf32> to vector<8x256xf32>
    %cst_80 = arith.constant dense<0.000000e+00> : vector<8xf32>
    %286 = vector.multi_reduction <add>, %285, %cst_80 [1] : vector<8x256xf32> to vector<8xf32>
    %287 = vector.shape_cast %286 : vector<8xf32> to vector<8x1xf32>
    %cst_81 = arith.constant 2.560000e+02 : f32
    %288 = vector.broadcast %cst_81 : f32 to vector<8x1xf32>
    %289 = arith.divf %287, %288 : vector<8x1xf32>
    %290 = tpu.concatenate %284, %289 in 1 : vector<8x1xf32>, vector<8x1xf32> -> vector<8x2xf32>
    %291 = tpu.iota {dimensions = array<i32: 0>} : vector<8x2xi32>
    %c1_i32_82 = arith.constant 1 : i32
    %292 = vector.broadcast %c1_i32_82 : i32 to vector<8x2xi32>
    %293 = arith.cmpi sge, %291, %292 : vector<8x2xi32>
    %c1_i32_83 = arith.constant 1 : i32
    %294 = tpu.dynamic_rotate %290 by %c1_i32_83 dim 0 : vector<8x2xf32>, i32 -> vector<8x2xf32>
    %cst_84 = arith.constant 0.000000e+00 : f32
    %295 = vector.broadcast %cst_84 : f32 to vector<8x2xf32>
    %296 = arith.select %293, %294, %295 : vector<8x2xi1>, vector<8x2xf32>
    %c6_i32 = arith.constant 6 : i32
    %297 = vector.broadcast %c6_i32 : i32 to vector<8x2xi32>
    %298 = arith.cmpi sle, %291, %297 : vector<8x2xi32>
    %c7_i32 = arith.constant 7 : i32
    %299 = tpu.dynamic_rotate %290 by %c7_i32 dim 0 : vector<8x2xf32>, i32 -> vector<8x2xf32>
    %cst_85 = arith.constant 0.000000e+00 : f32
    %300 = vector.broadcast %cst_85 : f32 to vector<8x2xf32>
    %301 = arith.select %298, %299, %300 : vector<8x2xi1>, vector<8x2xf32>
    %302 = vector.broadcast %277 : f32 to vector<8x2xf32>
    %303 = arith.mulf %302, %296 : vector<8x2xf32>
    %304 = vector.broadcast %278 : f32 to vector<8x2xf32>
    %305 = arith.mulf %304, %290 : vector<8x2xf32>
    %306 = arith.addf %303, %305 : vector<8x2xf32>
    %307 = vector.broadcast %279 : f32 to vector<8x2xf32>
    %308 = arith.mulf %307, %301 : vector<8x2xf32>
    %309 = arith.addf %306, %308 : vector<8x2xf32>
    %310 = arith.negf %309 : vector<8x2xf32>
    %311 = math.exp %310 : vector<8x2xf32>
    %cst_86 = arith.constant 1.000000e+00 : f32
    %312 = vector.broadcast %cst_86 : f32 to vector<8x2xf32>
    %313 = arith.addf %312, %311 : vector<8x2xf32>
    %314 = arith.divf %312, %313 : vector<8x2xf32>
    %315 = vector.extract_strided_slice %314 {offsets = [0, 0], sizes = [8, 1], strides = [1, 1]} : vector<8x2xf32> to vector<8x1xf32>
    %c256_i32_87 = arith.constant 256 : i32
    %316 = vector.broadcast %c256_i32_87 : i32 to vector<1x512xi32>
    %317 = arith.cmpi sge, %15, %316 : vector<1x512xi32>
    %318 = vector.extract_strided_slice %314 {offsets = [0, 1], sizes = [8, 1], strides = [1, 1]} : vector<8x2xf32> to vector<8x1xf32>
    %319 = vector.shape_cast %317 : vector<1x512xi1> to vector<1x512xi1>
    %320 = vector.broadcast %319 : vector<1x512xi1> to vector<8x512xi1>
    %321 = vector.shape_cast %318 : vector<8x1xf32> to vector<8x1xf32>
    %322 = vector.broadcast %321 : vector<8x1xf32> to vector<8x512xf32>
    %323 = vector.shape_cast %315 : vector<8x1xf32> to vector<8x1xf32>
    %324 = vector.broadcast %323 : vector<8x1xf32> to vector<8x512xf32>
    %325 = arith.select %320, %322, %324 : vector<8x512xi1>, vector<8x512xf32>
    %326 = arith.mulf %276, %325 : vector<8x512xf32>
    %327 = arith.addf %326, %4 : vector<8x512xf32>
    %328 = vector.extract_strided_slice %327 {offsets = [0, 0], sizes = [8, 256], strides = [1, 1]} : vector<8x512xf32> to vector<8x256xf32>
    %c0_88 = arith.constant 0 : index
    %c0_89 = arith.constant 0 : index
    %c0_90 = arith.constant 0 : index
    %329 = vector.load %arg4[%c0_88, %c0_89, %c0_90] : memref<2x8x256xf32, #tpu.memory_space<vmem>>, vector<1x8x256xf32>
    %330 = vector.shape_cast %329 : vector<1x8x256xf32> to vector<8x256xf32>
    %331 = vector.shape_cast %328 : vector<8x256xf32> to vector<1x8x256xf32>
    tpu.vector_store %arg4[%c0_88, %c0_89, %c0_90], %331 {strides = array<i32>} : memref<2x8x256xf32, #tpu.memory_space<vmem>>, vector<1x8x256xf32>,
    %332 = vector.extract_strided_slice %327 {offsets = [0, 256], sizes = [8, 256], strides = [1, 1]} : vector<8x512xf32> to vector<8x256xf32>
    %c1_91 = arith.constant 1 : index
    %c0_92 = arith.constant 0 : index
    %c0_93 = arith.constant 0 : index
    %333 = vector.load %arg4[%c1_91, %c0_92, %c0_93] : memref<2x8x256xf32, #tpu.memory_space<vmem>>, vector<1x8x256xf32>
    %334 = vector.shape_cast %333 : vector<1x8x256xf32> to vector<8x256xf32>
    %335 = vector.shape_cast %332 : vector<8x256xf32> to vector<1x8x256xf32>
    tpu.vector_store %arg4[%c1_91, %c0_92, %c0_93], %335 {strides = array<i32>} : memref<2x8x256xf32, #tpu.memory_space<vmem>>, vector<1x8x256xf32>,
    return
  }
  func.func @transform_0(%arg0: i32) -> (i32, i32, i32) {
    %c0_i32 = arith.constant 0 : i32
    %c0_i32_0 = arith.constant 0 : i32
    %c0_i32_1 = arith.constant 0 : i32
    return %arg0, %c0_i32, %c0_i32_0 : i32, i32, i32
  }
  func.func @transform_1(%arg0: i32) -> (i32, i32) {
    %c0_i32 = arith.constant 0 : i32
    %c0_i32_0 = arith.constant 0 : i32
    %c0_i32_1 = arith.constant 0 : i32
    return %c0_i32, %c0_i32_0 : i32, i32
  }
  func.func @transform_2(%arg0: i32) -> i32 {
    %c0_i32 = arith.constant 0 : i32
    %c0_i32_0 = arith.constant 0 : i32
    return %c0_i32 : i32
  }
  func.func @transform_3(%arg0: i32) -> (i32, i32, i32) {
    %c0_i32 = arith.constant 0 : i32
    %c0_i32_0 = arith.constant 0 : i32
    %c0_i32_1 = arith.constant 0 : i32
    return %arg0, %c0_i32, %c0_i32_0 : i32, i32, i32
  }
}

</mosaic_0001>

<llo_original>
// kernel: tpu_custom_call.1
$region0: #{tpu_custom_call.1}
  #allocation0 [shape = 'u32[]', space=smem, size = 0x4, offset = 0x4, fixed_abs, tag = 'smem constant byte address 0x4 - core index']
  #allocation1 [shape = 'u32[72,128]{1,0:T(1,128)}', space=vmem, size = 0x9000, scoped, tag = 'internal scratch']
  %s0 = inlined_call_operand.hbm [shape: f32[2,8,256], index: 0, kind: input, shape index: {}]
  %s1 = inlined_call_operand.hbm [shape: f32[64,128], index: 1, kind: input, shape index: {}]
  %s2 = inlined_call_operand.vmem [shape: f32[3], index: 2, kind: input, shape index: {}]
  %s3 = inlined_call_operand.hbm [shape: f32[2,8,256], index: 3, kind: output, shape index: {}]
  %s4 = sld [smem:[#allocation0]]
  $region34: #{tpu_custom_call.1} parent=0
    _
  %s6 = ssub.s32 1, %s4
  %s7 = scalar_select 0, %s6, %s4
  $region1: #{tpu_custom_call.1} parent=0
    #allocation2 [shape = 'u8[16384]{0}', space=vmem, size = 0x4000, scoped, tag = 'input window, operand 0, single buffered']
    #allocation3 [shape = 's32[1]{0}', space=sflag, size = 0x4, scoped, tag = 'scoped memory for tpu_custom_call.1']
    #allocation4 [shape = 's32[1]{0}', space=sflag, size = 0x4, scoped, tag = 'scoped memory for tpu_custom_call.1']
    #allocation5 [shape = 's32[1]{0}', space=sflag, size = 0x4, scoped, tag = 'scoped memory for tpu_custom_call.1']
    #allocation6 [shape = 'u8[32768]{0}', space=vmem, size = 0x8000, scoped, tag = 'input window, operand 1, single buffered']
    #allocation7 [shape = 's32[1]{0}', space=sflag, size = 0x4, scoped, tag = 'scoped memory for tpu_custom_call.1']
    #allocation8 [shape = 'u8[512]{0}', space=smem, size = 0x200, scoped, tag = 'input window, operand 2, single buffered']
    #allocation9 [shape = 'u8[16384]{0}', space=vmem, size = 0x4000, scoped, tag = 'output window, operand 0, single buffered']
    %8 = vsyncpa [#allocation3], 0
    %9 = vsyncpa [#allocation7], 0
    %10 = vsyncpa [#allocation5], 0
    %11 = vsyncpa [#allocation4], 0
    // Predicated region
    $region2: #{tpu_custom_call.1} parent=1 // pred_check
      _
    $region3: #{tpu_custom_call.1} parent=1 // pred_check_branch
      %13 = sbr.rel (0) target = $region5
    $region4: #{tpu_custom_call.1} parent=1 // pred_region
      %15 = vsyncadd [#allocation3], 0
      %s16 = sshll.u32 %s0, 4
      %s17 = int_to_ptr.hbm [resolvable:$true] %s16
      %s18 = sshll.u32 [#allocation2], 4
      %s19 = int_to_ptr.vmem [resolvable:$true] %s18
      %24 = dma.hbm_to_vmem [thread:$0]  %s17, 512, %s19, [#allocation3], 256, 256, 16
    $region5: #{tpu_custom_call.1} parent=1 // pred_fallthru
      _
    // Predicated region
    $region6: #{tpu_custom_call.1} parent=1 // pred_check
      _
    $region7: #{tpu_custom_call.1} parent=1 // pred_check_branch
      %26 = sbr.rel (0) target = $region9
    $region8: #{tpu_custom_call.1} parent=1 // pred_region
      %28 = vsyncadd [#allocation7], 0
      %s29 = sshll.u32 %s1, 4
      %s30 = int_to_ptr.hbm [resolvable:$true] %s29
      %s31 = sshll.u32 [#allocation6], 4
      %s32 = int_to_ptr.vmem [resolvable:$true] %s31
      %37 = dma.hbm_to_vmem [thread:$0]  %s30, 1024, %s32, [#allocation7], 128, 128, 8
    $region9: #{tpu_custom_call.1} parent=1 // pred_fallthru
      _
    // Predicated region
    $region10: #{tpu_custom_call.1} parent=1 // pred_check
      _
    $region11: #{tpu_custom_call.1} parent=1 // pred_check_branch
      %39 = sbr.rel (0) target = $region13
    $region12: #{tpu_custom_call.1} parent=1 // pred_region
      %41 = vsyncadd [#allocation5], 0
      %s43 = sshll.u32 %s2, 4
      %s44 = int_to_ptr.vmem [resolvable:$true] %s43
      %46 = dma.vmem_to_smem %s44, 16, [#allocation8], [#allocation5]
    $region13: #{tpu_custom_call.1} parent=1 // pred_fallthru
      _
    // Predicated region
    $region14: #{tpu_custom_call.1} parent=1 // pred_check
      _
    $region15: #{tpu_custom_call.1} parent=1 // pred_check_branch
      %48 = sbr.rel (0) target = $region17
    $region16: #{tpu_custom_call.1} parent=1 // pred_region
      %50 = dma.done [#allocation3], 512
    $region17: #{tpu_custom_call.1} parent=1 // pred_fallthru
      _
    // Predicated region
    $region18: #{tpu_custom_call.1} parent=1 // pred_check
      _
    $region19: #{tpu_custom_call.1} parent=1 // pred_check_branch
      %52 = sbr.rel (0) target = $region21
    $region20: #{tpu_custom_call.1} parent=1 // pred_region
      %54 = dma.done [#allocation7], 1024
    $region21: #{tpu_custom_call.1} parent=1 // pred_fallthru
      _
    // Predicated region
    $region22: #{tpu_custom_call.1} parent=1 // pred_check
      _
    $region23: #{tpu_custom_call.1} parent=1 // pred_check_branch
      %56 = sbr.rel (0) target = $region25
    $region24: #{tpu_custom_call.1} parent=1 // pred_region
      %58 = dma.done [#allocation5], 16
    $region25: #{tpu_custom_call.1} parent=1 // pred_fallthru
      _
    %59 = sfence
    %v60 = vld [vmem:[#allocation2] sm:$0xff]
    %v61 = vld [vmem:[#allocation2 + $0x8] sm:$0xff]
    %s62 = scalar_lea.vmem [#allocation2], 16
    %v63 = vld [vmem:[%s62] sm:$0xff]
    %v64 = vld [vmem:[%s62 + $0x8] sm:$0xff]
    %v65 = vld [vmem:[#allocation6] sm:$0xff]
    %v66 = vld [vmem:[#allocation6 + $0x8] sm:$0xff]
    %v67 = vld [vmem:[#allocation6 + $0x10] sm:$0xff]
    %v68 = vld [vmem:[#allocation6 + $0x18] sm:$0xff]
    %v69 = vld [vmem:[#allocation6 + $0x20] sm:$0xff]
    %v70 = vld [vmem:[#allocation6 + $0x28] sm:$0xff]
    %v71 = vld [vmem:[#allocation6 + $0x30] sm:$0xff]
    %v72 = vld [vmem:[#allocation6 + $0x38] sm:$0xff]
    %v73 = vld [vmem:[#allocation6 + $0x30] sm:$0xff]
    %v74 = vlaneseq
    %v75 = vand.u32 %v74, 127
    %v76 = vadd.s32 %v75, 128
    %v77 = vadd.s32 %v75, 256
    %v78 = vadd.s32 %v75, 384
    %vm79 = vcmp.lt.s32.totalorder %v75, 0
    %v80 = vsub.s32 0, %v75
    %v81 = vsel %vm79, %v80, %v75
    %v82 = vshrl.u32 %v81, 8
    %v83 = vand.u32 %v81, 255
    %v84 = vsub.s32 0, %v83
    %v85 = vsel %vm79, %v84, %v83
    %vm86 = vcmp.lt.s32.totalorder %v76, 0
    %v87 = vsub.s32 0, %v76
    %v88 = vsel %vm86, %v87, %v76
    %v89 = vshrl.u32 %v88, 8
    %v90 = vand.u32 %v88, 255
    %v91 = vsub.s32 0, %v90
    %v92 = vsel %vm86, %v91, %v90
    %vm93 = vcmp.lt.s32.totalorder %v77, 0
    %v94 = vsub.s32 0, %v77
    %v95 = vsel %vm93, %v94, %v77
    %v96 = vshrl.u32 %v95, 8
    %v97 = vand.u32 %v95, 255
    %v98 = vsub.s32 0, %v97
    %v99 = vsel %vm93, %v98, %v97
    %vm100 = vcmp.lt.s32.totalorder %v78, 0
    %v101 = vsub.s32 0, %v78
    %v102 = vsel %vm100, %v101, %v78
    %v103 = vshrl.u32 %v102, 8
    %v104 = vand.u32 %v102, 255
    %v105 = vsub.s32 0, %v104
    %v106 = vsel %vm100, %v105, %v104
    %vm107 = vcmp.ne.s32.totalorder %v85, 0
    %vm108 = vcmp.ne.s32.totalorder %v92, 0
    %vm109 = vcmp.ne.s32.totalorder %v99, 0
    %vm110 = vcmp.ne.s32.totalorder %v106, 0
    %vm111 = vcmp.lt.s32.totalorder %v85, 0
    %vm112 = vcmp.lt.s32.totalorder %v92, 0
    %vm113 = vcmp.lt.s32.totalorder %v99, 0
    %vm114 = vcmp.lt.s32.totalorder %v106, 0
    %vm115 = vmand %vm111, %vm107
    %vm116 = vmand %vm112, %vm108
    %vm117 = vmand %vm113, %vm109
    %vm118 = vmand %vm114, %vm110
    %v119 = vadd.s32 %v85, 256
    %v120 = vadd.s32 %v92, 256
    %v121 = vadd.s32 %v99, 256
    %v122 = vadd.s32 %v106, 256
    %v123 = vsel %vm115, %v119, %v85
    %v124 = vsel %vm116, %v120, %v92
    %v125 = vsel %vm117, %v121, %v99
    %v126 = vsel %vm118, %v122, %v106
    %vm127 = vcmp.lt.s32.totalorder %v123, 0
    %v128 = vsub.s32 0, %v123
    %v129 = vsel %vm127, %v128, %v123
    %v130 = vshrl.u32 %v129, 4
    %v131 = vand.u32 %v129, 15
    %v132 = vsub.s32 0, %v131
    %v133 = vsel %vm127, %v132, %v131
    %vm134 = vcmp.lt.s32.totalorder %v124, 0
    %v135 = vsub.s32 0, %v124
    %v136 = vsel %vm134, %v135, %v124
    %v137 = vshrl.u32 %v136, 4
    %v138 = vand.u32 %v136, 15
    %v139 = vsub.s32 0, %v138
    %v140 = vsel %vm134, %v139, %v138
    %vm141 = vcmp.lt.s32.totalorder %v125, 0
    %v142 = vsub.s32 0, %v125
    %v143 = vsel %vm141, %v142, %v125
    %v144 = vshrl.u32 %v143, 4
    %v145 = vand.u32 %v143, 15
    %v146 = vsub.s32 0, %v145
    %v147 = vsel %vm141, %v146, %v145
    %vm148 = vcmp.lt.s32.totalorder %v126, 0
    %v149 = vsub.s32 0, %v126
    %v150 = vsel %vm148, %v149, %v126
    %v151 = vshrl.u32 %v150, 4
    %v152 = vand.u32 %v150, 15
    %v153 = vsub.s32 0, %v152
    %v154 = vsel %vm148, %v153, %v152
    %vm155 = vcmp.ne.s32.totalorder %v133, 0
    %vm156 = vcmp.ne.s32.totalorder %v140, 0
    %vm157 = vcmp.ne.s32.totalorder %v147, 0
    %vm158 = vcmp.ne.s32.totalorder %v154, 0
    %vm159 = vcmp.lt.s32.totalorder %v133, 0
    %vm160 = vcmp.lt.s32.totalorder %v140, 0
    %vm161 = vcmp.lt.s32.totalorder %v147, 0
    %vm162 = vcmp.lt.s32.totalorder %v154, 0
    %vm163 = vmand %vm159, %vm155
    %vm164 = vmand %vm160, %vm156
    %vm165 = vmand %vm161, %vm157
    %vm166 = vmand %vm162, %vm158
    %v167 = vadd.s32 %v133, 16
    %v168 = vadd.s32 %v140, 16
    %v169 = vadd.s32 %v147, 16
    %v170 = vadd.s32 %v154, 16
    %v171 = vsel %vm163, %v167, %v133
    %v172 = vsel %vm164, %v168, %v140
    %v173 = vsel %vm165, %v169, %v147
    %v174 = vsel %vm166, %v170, %v154
    %vm175 = vcmp.ge.s32.totalorder %v123, 16
    %vm176 = vcmp.ge.s32.totalorder %v124, 16
    %vm177 = vcmp.ge.s32.totalorder %v125, 16
    %vm178 = vcmp.ge.s32.totalorder %v126, 16
    %vm179 = vcmp.lt.s32.totalorder %v123, 240
    %vm180 = vcmp.lt.s32.totalorder %v124, 240
    %vm181 = vcmp.lt.s32.totalorder %v125, 240
    %vm182 = vcmp.lt.s32.totalorder %v126, 240
    %vm183 = vcmp.ne.s32.totalorder %v171, 0
    %vm184 = vcmp.ne.s32.totalorder %v172, 0
    %vm185 = vcmp.ne.s32.totalorder %v173, 0
    %vm186 = vcmp.ne.s32.totalorder %v174, 0
    %vm187 = vcmp.ne.s32.totalorder %v171, 15
    %vm188 = vcmp.ne.s32.totalorder %v172, 15
    %vm189 = vcmp.ne.s32.totalorder %v173, 15
    %vm190 = vcmp.ne.s32.totalorder %v174, 15
    %vm191 = vmand %vm175, %vm183
    %vm192 = vmand %vm176, %vm184
    %vm193 = vmand %vm177, %vm185
    %vm194 = vmand %vm178, %vm186
    %vm195 = vmand %vm175, %vm187
    %vm196 = vmand %vm176, %vm188
    %vm197 = vmand %vm177, %vm189
    %vm198 = vmand %vm178, %vm190
    %vm199 = vmand %vm179, %vm183
    %vm200 = vmand %vm180, %vm184
    %vm201 = vmand %vm181, %vm185
    %vm202 = vmand %vm182, %vm186
    %vm203 = vmand %vm179, %vm187
    %vm204 = vmand %vm180, %vm188
    %vm205 = vmand %vm181, %vm189
    %vm206 = vmand %vm182, %vm190
    %207 = vrot.lane.b32.xlu0 %v60, 17
    %v208 = vpop.permute.xlu0 %207
    %209 = vrot.lane.b32.xlu0 %v61, 17
    %v210 = vpop.permute.xlu0 %209
    %211 = vrot.lane.b32.xlu0 %v63, 17
    %v212 = vpop.permute.xlu0 %211
    %213 = vrot.lane.b32.xlu0 %v64, 17
    %v214 = vpop.permute.xlu0 %213
    %vm215 = vcmp.lt.s32.totalorder %v75, 17
    %v216 = vsel %vm215, %v212, %v214
    %v217 = vsel %vm215, %v210, %v212
    %v218 = vsel %vm215, %v208, %v210
    %v219 = vsel %vm215, %v214, %v208
    %v220 = vsel %vm191, 1, 0
    %v221 = vsel %vm192, 1, 0
    %v222 = vsel %vm193, 1, 0
    %v223 = vsel %vm194, 1, 0
    %vm224 = vcmp.eq.s32.totalorder %v220, 1
    %vm225 = vcmp.eq.s32.totalorder %v221, 1
    %vm226 = vcmp.eq.s32.totalorder %v222, 1
    %vm227 = vcmp.eq.s32.totalorder %v223, 1
    %v228 = vsel %vm224, %v219, 0.0
    %v229 = vsel %vm225, %v218, 0.0
    %v230 = vsel %vm226, %v217, 0.0
    %v231 = vsel %vm227, %v216, 0.0
    %232 = vrot.lane.b32.xlu0 %v60, 16
    %v233 = vpop.permute.xlu0 %232
    %234 = vrot.lane.b32.xlu0 %v61, 16
    %v235 = vpop.permute.xlu0 %234
    %236 = vrot.lane.b32.xlu0 %v63, 16
    %v237 = vpop.permute.xlu0 %236
    %238 = vrot.lane.b32.xlu0 %v64, 16
    %v239 = vpop.permute.xlu0 %238
    %vm240 = vcmp.lt.s32.totalorder %v75, 16
    %v241 = vsel %vm240, %v237, %v239
    %v242 = vsel %vm240, %v235, %v237
    %v243 = vsel %vm240, %v233, %v235
    %v244 = vsel %vm240, %v239, %v233
    %v245 = vsel %vm175, 1, 0
    %v246 = vsel %vm176, 1, 0
    %v247 = vsel %vm177, 1, 0
    %v248 = vsel %vm178, 1, 0
    %vm249 = vcmp.eq.s32.totalorder %v245, 1
    %vm250 = vcmp.eq.s32.totalorder %v246, 1
    %vm251 = vcmp.eq.s32.totalorder %v247, 1
    %vm252 = vcmp.eq.s32.totalorder %v248, 1
    %v253 = vsel %vm249, %v244, 0.0
    %v254 = vsel %vm250, %v243, 0.0
    %v255 = vsel %vm251, %v242, 0.0
    %v256 = vsel %vm252, %v241, 0.0
    %257 = vrot.lane.b32.xlu0 %v60, 15
    %v258 = vpop.permute.xlu0 %257
    %259 = vrot.lane.b32.xlu0 %v61, 15
    %v260 = vpop.permute.xlu0 %259
    %261 = vrot.lane.b32.xlu0 %v63, 15
    %v262 = vpop.permute.xlu0 %261
    %263 = vrot.lane.b32.xlu0 %v64, 15
    %v264 = vpop.permute.xlu0 %263
    %vm265 = vcmp.lt.s32.totalorder %v75, 15
    %v266 = vsel %vm265, %v262, %v264
    %v267 = vsel %vm265, %v260, %v262
    %v268 = vsel %vm265, %v258, %v260
    %v269 = vsel %vm265, %v264, %v258
    %v270 = vsel %vm195, 1, 0
    %v271 = vsel %vm196, 1, 0
    %v272 = vsel %vm197, 1, 0
    %v273 = vsel %vm198, 1, 0
    %vm274 = vcmp.eq.s32.totalorder %v270, 1
    %vm275 = vcmp.eq.s32.totalorder %v271, 1
    %vm276 = vcmp.eq.s32.totalorder %v272, 1
    %vm277 = vcmp.eq.s32.totalorder %v273, 1
    %v278 = vsel %vm274, %v269, 0.0
    %v279 = vsel %vm275, %v268, 0.0
    %v280 = vsel %vm276, %v267, 0.0
    %v281 = vsel %vm277, %v266, 0.0
    %282 = vrot.lane.b32.xlu0 %v60, 1
    %v283 = vpop.permute.xlu0 %282
    %284 = vrot.lane.b32.xlu0 %v61, 1
    %v285 = vpop.permute.xlu0 %284
    %286 = vrot.lane.b32.xlu0 %v63, 1
    %v287 = vpop.permute.xlu0 %286
    %288 = vrot.lane.b32.xlu0 %v64, 1
    %v289 = vpop.permute.xlu0 %288
    %vm290 = vcmp.lt.s32.totalorder %v75, 1
    %v291 = vsel %vm290, %v287, %v289
    %v292 = vsel %vm290, %v285, %v287
    %v293 = vsel %vm290, %v283, %v285
    %v294 = vsel %vm290, %v289, %v283
    %v295 = vsel %vm183, 1, 0
    %v296 = vsel %vm184, 1, 0
    %v297 = vsel %vm185, 1, 0
    %v298 = vsel %vm186, 1, 0
    %vm299 = vcmp.eq.s32.totalorder %v295, 1
    %vm300 = vcmp.eq.s32.totalorder %v296, 1
    %vm301 = vcmp.eq.s32.totalorder %v297, 1
    %vm302 = vcmp.eq.s32.totalorder %v298, 1
    %v303 = vsel %vm299, %v294, 0.0
    %v304 = vsel %vm300, %v293, 0.0
    %v305 = vsel %vm301, %v292, 0.0
    %v306 = vsel %vm302, %v291, 0.0
    %307 = vrot.lane.b32.xlu0 %v60, 127
    %v308 = vpop.permute.xlu0 %307
    %309 = vrot.lane.b32.xlu0 %v61, 127
    %v310 = vpop.permute.xlu0 %309
    %311 = vrot.lane.b32.xlu0 %v63, 127
    %v312 = vpop.permute.xlu0 %311
    %313 = vrot.lane.b32.xlu0 %v64, 127
    %v314 = vpop.permute.xlu0 %313
    %vm315 = vcmp.lt.s32.totalorder %v75, 127
    %v316 = vsel %vm315, %v312, %v314
    %v317 = vsel %vm315, %v310, %v312
    %v318 = vsel %vm315, %v308, %v310
    %v319 = vsel %vm315, %v314, %v308
    %v320 = vsel %vm187, 1, 0
    %v321 = vsel %vm188, 1, 0
    %v322 = vsel %vm189, 1, 0
    %v323 = vsel %vm190, 1, 0
    %vm324 = vcmp.eq.s32.totalorder %v320, 1
    %vm325 = vcmp.eq.s32.totalorder %v321, 1
    %vm326 = vcmp.eq.s32.totalorder %v322, 1
    %vm327 = vcmp.eq.s32.totalorder %v323, 1
    %v328 = vsel %vm324, %v318, 0.0
    %v329 = vsel %vm325, %v317, 0.0
    %v330 = vsel %vm326, %v316, 0.0
    %v331 = vsel %vm327, %v319, 0.0
    %332 = vrot.lane.b32.xlu0 %v60, 113
    %v333 = vpop.permute.xlu0 %332
    %334 = vrot.lane.b32.xlu0 %v61, 113
    %v335 = vpop.permute.xlu0 %334
    %336 = vrot.lane.b32.xlu0 %v63, 113
    %v337 = vpop.permute.xlu0 %336
    %338 = vrot.lane.b32.xlu0 %v64, 113
    %v339 = vpop.permute.xlu0 %338
    %vm340 = vcmp.lt.s32.totalorder %v75, 113
    %v341 = vsel %vm340, %v337, %v339
    %v342 = vsel %vm340, %v335, %v337
    %v343 = vsel %vm340, %v333, %v335
    %v344 = vsel %vm340, %v339, %v333
    %v345 = vsel %vm199, 1, 0
    %v346 = vsel %vm200, 1, 0
    %v347 = vsel %vm201, 1, 0
    %v348 = vsel %vm202, 1, 0
    %vm349 = vcmp.eq.s32.totalorder %v345, 1
    %vm350 = vcmp.eq.s32.totalorder %v346, 1
    %vm351 = vcmp.eq.s32.totalorder %v347, 1
    %vm352 = vcmp.eq.s32.totalorder %v348, 1
    %v353 = vsel %vm349, %v343, 0.0
    %v354 = vsel %vm350, %v342, 0.0
    %v355 = vsel %vm351, %v341, 0.0
    %v356 = vsel %vm352, %v344, 0.0
    %357 = vrot.lane.b32.xlu0 %v60, 112
    %v358 = vpop.permute.xlu0 %357
    %359 = vrot.lane.b32.xlu0 %v61, 112
    %v360 = vpop.permute.xlu0 %359
    %361 = vrot.lane.b32.xlu0 %v63, 112
    %v362 = vpop.permute.xlu0 %361
    %363 = vrot.lane.b32.xlu0 %v64, 112
    %v364 = vpop.permute.xlu0 %363
    %vm365 = vcmp.lt.s32.totalorder %v75, 112
    %v366 = vsel %vm365, %v362, %v364
    %v367 = vsel %vm365, %v360, %v362
    %v368 = vsel %vm365, %v358, %v360
    %v369 = vsel %vm365, %v364, %v358
    %v370 = vsel %vm179, 1, 0
    %v371 = vsel %vm180, 1, 0
    %v372 = vsel %vm181, 1, 0
    %v373 = vsel %vm182, 1, 0
    %vm374 = vcmp.eq.s32.totalorder %v370, 1
    %vm375 = vcmp.eq.s32.totalorder %v371, 1
    %vm376 = vcmp.eq.s32.totalorder %v372, 1
    %vm377 = vcmp.eq.s32.totalorder %v373, 1
    %v378 = vsel %vm374, %v368, 0.0
    %v379 = vsel %vm375, %v367, 0.0
    %v380 = vsel %vm376, %v366, 0.0
    %v381 = vsel %vm377, %v369, 0.0
    %382 = vrot.lane.b32.xlu0 %v60, 111
    %v383 = vpop.permute.xlu0 %382
    %384 = vrot.lane.b32.xlu0 %v61, 111
    %v385 = vpop.permute.xlu0 %384
    %386 = vrot.lane.b32.xlu0 %v63, 111
    %v387 = vpop.permute.xlu0 %386
    %388 = vrot.lane.b32.xlu0 %v64, 111
    %v389 = vpop.permute.xlu0 %388
    %vm390 = vcmp.lt.s32.totalorder %v75, 111
    %v391 = vsel %vm390, %v387, %v389
    %v392 = vsel %vm390, %v385, %v387
    %v393 = vsel %vm390, %v383, %v385
    %v394 = vsel %vm390, %v389, %v383
    %v395 = vsel %vm203, 1, 0
    %v396 = vsel %vm204, 1, 0
    %v397 = vsel %vm205, 1, 0
    %v398 = vsel %vm206, 1, 0
    %vm399 = vcmp.eq.s32.totalorder %v395, 1
    %vm400 = vcmp.eq.s32.totalorder %v396, 1
    %vm401 = vcmp.eq.s32.totalorder %v397, 1
    %vm402 = vcmp.eq.s32.totalorder %v398, 1
    %v403 = vsel %vm399, %v393, 0.0
    %v404 = vsel %vm400, %v392, 0.0
    %v405 = vsel %vm401, %v391, 0.0
    %v406 = vsel %vm402, %v394, 0.0
    %408 = vset.pattern.permute.xlu0 1
    %409 = vperm.xlu0 %408, %v73
    %v410 = vpop.permute.xlu0 %409
    %vm412 = vcmask 588800
    %v414 = vsel %vm412, %v65, 0
    %416 = vmatpush.msra.mxu0 0.0
    %417 = vmatpush.msra.mxu0 0.0
    %418 = vmatpush.msra.mxu0 0.0
    %419 = vmatpush.msra.mxu0 0.0
    %420 = vmatpush.msra.mxu0 0.0
    %421 = vmatpush.msra.mxu0 0.0
    %422 = vmatpush.msra.mxu0 0.0
    %423 = vmatpush.msra.mxu0 %v403
    %424 = vmatpush.msra.mxu0 %v378
    %425 = vmatpush.msra.mxu0 %v353
    %426 = vmatpush.msra.mxu0 %v328
    %427 = vmatpush.msra.mxu0 %v60
    %428 = vmatpush.msra.mxu0 %v303
    %429 = vmatpush.msra.mxu0 %v278
    %430 = vmatpush.msra.mxu0 %v253
    %431 = vmatpush.msra.mxu0 %v228
    %432 = vmatmul.f32.gmra.mxu0 %v414
    %v433 = vpop.f32.mrf.mxu0
    %v434 = vadd.f32 %v410, %v433
    %435 = vdwg.mxu0
    %436 = vmatpush.msra.mxu0 0.0
    %437 = vmatpush.msra.mxu0 0.0
    %438 = vmatpush.msra.mxu0 0.0
    %439 = vmatpush.msra.mxu0 0.0
    %440 = vmatpush.msra.mxu0 0.0
    %441 = vmatpush.msra.mxu0 0.0
    %442 = vmatpush.msra.mxu0 0.0
    %443 = vmatpush.msra.mxu0 %v404
    %444 = vmatpush.msra.mxu0 %v379
    %445 = vmatpush.msra.mxu0 %v354
    %446 = vmatpush.msra.mxu0 %v329
    %447 = vmatpush.msra.mxu0 %v61
    %448 = vmatpush.msra.mxu0 %v304
    %449 = vmatpush.msra.mxu0 %v279
    %450 = vmatpush.msra.mxu0 %v254
    %451 = vmatpush.msra.mxu0 %v229
    %452 = vmatmul.f32.gmra.mxu0 %v414
    %v453 = vpop.f32.mrf.mxu0
    %v454 = vadd.f32 %v410, %v453
    %455 = vdwg.mxu0
    %456 = vmatpush.msra.mxu0 0.0
    %457 = vmatpush.msra.mxu0 0.0
    %458 = vmatpush.msra.mxu0 0.0
    %459 = vmatpush.msra.mxu0 0.0
    %460 = vmatpush.msra.mxu0 0.0
    %461 = vmatpush.msra.mxu0 0.0
    %462 = vmatpush.msra.mxu0 0.0
    %463 = vmatpush.msra.mxu0 %v405
    %464 = vmatpush.msra.mxu0 %v380
    %465 = vmatpush.msra.mxu0 %v355
    %466 = vmatpush.msra.mxu0 %v330
    %467 = vmatpush.msra.mxu0 %v63
    %468 = vmatpush.msra.mxu0 %v305
    %469 = vmatpush.msra.mxu0 %v280
    %470 = vmatpush.msra.mxu0 %v255
    %471 = vmatpush.msra.mxu0 %v230
    %472 = vmatmul.f32.gmra.mxu0 %v414
    %v473 = vpop.f32.mrf.mxu0
    %v474 = vadd.f32 %v410, %v473
    %475 = vdwg.mxu0
    %476 = vmatpush.msra.mxu0 0.0
    %477 = vmatpush.msra.mxu0 0.0
    %478 = vmatpush.msra.mxu0 0.0
    %479 = vmatpush.msra.mxu0 0.0
    %480 = vmatpush.msra.mxu0 0.0
    %481 = vmatpush.msra.mxu0 0.0
    %482 = vmatpush.msra.mxu0 0.0
    %483 = vmatpush.msra.mxu0 %v406
    %484 = vmatpush.msra.mxu0 %v381
    %485 = vmatpush.msra.mxu0 %v356
    %486 = vmatpush.msra.mxu0 %v331
    %487 = vmatpush.msra.mxu0 %v64
    %488 = vmatpush.msra.mxu0 %v306
    %489 = vmatpush.msra.mxu0 %v281
    %490 = vmatpush.msra.mxu0 %v256
    %491 = vmatpush.msra.mxu0 %v231
    %492 = vmatmul.f32.gmra.mxu0 %v414
    %v493 = vpop.f32.mrf.mxu0
    %v494 = vadd.f32 %v410, %v493
    %495 = vdwg.mxu0
    %v496 = vmax.f32 %v434, 0.0
    %v497 = vmax.f32 %v454, 0.0
    %v498 = vmax.f32 %v474, 0.0
    %v499 = vmax.f32 %v494, 0.0
    %501 = vset.pattern.permute.xlu0 0
    %502 = vperm.xlu0 %501, %v71
    %v503 = vpop.permute.xlu0 %502
    %506 = vset.pattern.permute.xlu0 0
    %507 = vperm.xlu0 %506, %v72
    %v508 = vpop.permute.xlu0 %507
    %vm510 = vcmask 64512
    %v512 = vsel %vm510, %v66, 0
    %v515 = vsel %vm510, %v67, 0
    %517 = vmatpush.msra.mxu0 0.0
    %518 = vmatpush.msra.mxu0 0.0
    %519 = vmatpush.msra.mxu0 0.0
    %520 = vmatpush.msra.mxu0 0.0
    %521 = vmatpush.msra.mxu0 0.0
    %522 = vmatpush.msra.mxu0 0.0
    %523 = vmatpush.msra.mxu0 0.0
    %524 = vmatpush.msra.mxu0 0.0
    %525 = vmatpush.msra.mxu0 0.0
    %526 = vmatpush.msra.mxu0 0.0
    %527 = vmatpush.msra.mxu0 0.0
    %528 = vmatpush.msra.mxu0 0.0
    %529 = vmatpush.msra.mxu0 0.0
    %530 = vmatpush.msra.mxu0 0.0
    %531 = vmatpush.msra.mxu0 0.0
    %532 = vmatpush.msra.mxu0 %v496
    %533 = vmatmul.f32.gmra.mxu0 %v512
    %v534 = vpop.f32.mrf.mxu0
    %v535 = vadd.f32 %v503, %v534
    %536 = vmatmul.f32.gmra.mxu0 %v515
    %v537 = vpop.f32.mrf.mxu0
    %v538 = vadd.f32 %v508, %v537
    %539 = vdwg.mxu0
    %540 = vmatpush.msra.mxu0 0.0
    %541 = vmatpush.msra.mxu0 0.0
    %542 = vmatpush.msra.mxu0 0.0
    %543 = vmatpush.msra.mxu0 0.0
    %544 = vmatpush.msra.mxu0 0.0
    %545 = vmatpush.msra.mxu0 0.0
    %546 = vmatpush.msra.mxu0 0.0
    %547 = vmatpush.msra.mxu0 0.0
    %548 = vmatpush.msra.mxu0 0.0
    %549 = vmatpush.msra.mxu0 0.0
    %550 = vmatpush.msra.mxu0 0.0
    %551 = vmatpush.msra.mxu0 0.0
    %552 = vmatpush.msra.mxu0 0.0
    %553 = vmatpush.msra.mxu0 0.0
    %554 = vmatpush.msra.mxu0 0.0
    %555 = vmatpush.msra.mxu0 %v497
    %556 = vmatmul.f32.gmra.mxu0 %v512
    %v557 = vpop.f32.mrf.mxu0
    %v558 = vadd.f32 %v503, %v557
    %559 = vmatmul.f32.gmra.mxu0 %v515
    %v560 = vpop.f32.mrf.mxu0
    %v561 = vadd.f32 %v508, %v560
    %562 = vdwg.mxu0
    %563 = vmatpush.msra.mxu0 0.0
    %564 = vmatpush.msra.mxu0 0.0
    %565 = vmatpush.msra.mxu0 0.0
    %566 = vmatpush.msra.mxu0 0.0
    %567 = vmatpush.msra.mxu0 0.0
    %568 = vmatpush.msra.mxu0 0.0
    %569 = vmatpush.msra.mxu0 0.0
    %570 = vmatpush.msra.mxu0 0.0
    %571 = vmatpush.msra.mxu0 0.0
    %572 = vmatpush.msra.mxu0 0.0
    %573 = vmatpush.msra.mxu0 0.0
    %574 = vmatpush.msra.mxu0 0.0
    %575 = vmatpush.msra.mxu0 0.0
    %576 = vmatpush.msra.mxu0 0.0
    %577 = vmatpush.msra.mxu0 0.0
    %578 = vmatpush.msra.mxu0 %v498
    %579 = vmatmul.f32.gmra.mxu0 %v512
    %v580 = vpop.f32.mrf.mxu0
    %v581 = vadd.f32 %v503, %v580
    %582 = vmatmul.f32.gmra.mxu0 %v515
    %v583 = vpop.f32.mrf.mxu0
    %v584 = vadd.f32 %v508, %v583
    %585 = vdwg.mxu0
    %586 = vmatpush.msra.mxu0 0.0
    %587 = vmatpush.msra.mxu0 0.0
    %588 = vmatpush.msra.mxu0 0.0
    %589 = vmatpush.msra.mxu0 0.0
    %590 = vmatpush.msra.mxu0 0.0
    %591 = vmatpush.msra.mxu0 0.0
    %592 = vmatpush.msra.mxu0 0.0
    %593 = vmatpush.msra.mxu0 0.0
    %594 = vmatpush.msra.mxu0 0.0
    %595 = vmatpush.msra.mxu0 0.0
    %596 = vmatpush.msra.mxu0 0.0
    %597 = vmatpush.msra.mxu0 0.0
    %598 = vmatpush.msra.mxu0 0.0
    %599 = vmatpush.msra.mxu0 0.0
    %600 = vmatpush.msra.mxu0 0.0
    %601 = vmatpush.msra.mxu0 %v499
    %602 = vmatmul.f32.gmra.mxu0 %v512
    %v603 = vpop.f32.mrf.mxu0
    %v604 = vadd.f32 %v503, %v603
    %605 = vmatmul.f32.gmra.mxu0 %v515
    %v606 = vpop.f32.mrf.mxu0
    %v607 = vadd.f32 %v508, %v606
    %608 = vdwg.mxu0
    %v609 = vadd.f32 %v496, %v535
    %v610 = vadd.f32 %v497, %v558
    %v611 = vadd.f32 %v498, %v581
    %v612 = vadd.f32 %v499, %v604
    %613 = vrot.lane.b32.xlu0 %v609, 17
    %v614 = vpop.permute.xlu0 %613
    %615 = vrot.lane.b32.xlu0 %v610, 17
    %v616 = vpop.permute.xlu0 %615
    %617 = vrot.lane.b32.xlu0 %v611, 17
    %v618 = vpop.permute.xlu0 %617
    %619 = vrot.lane.b32.xlu0 %v612, 17
    %v620 = vpop.permute.xlu0 %619
    %v621 = vsel %vm215, %v618, %v620
    %v622 = vsel %vm215, %v616, %v618
    %v623 = vsel %vm215, %v614, %v616
    %v624 = vsel %vm215, %v620, %v614
    %v625 = vsel %vm224, %v624, 0.0
    %v626 = vsel %vm225, %v623, 0.0
    %v627 = vsel %vm226, %v622, 0.0
    %v628 = vsel %vm227, %v621, 0.0
    %630 = vset.pattern.permute.xlu0 0
    %631 = vperm.xlu0 %630, %v68
    %v632 = vpop.permute.xlu0 %631
    %v634 = vmul.f32 %v625, %v632
    %v635 = vmul.f32 %v626, %v632
    %v636 = vmul.f32 %v627, %v632
    %v637 = vmul.f32 %v628, %v632
    %638 = vset.pattern.permute.xlu0 2
    %639 = vperm.xlu0 %638, %v73
    %v640 = vpop.permute.xlu0 %639
    %v642 = vadd.f32 %v640, %v634
    %v643 = vadd.f32 %v640, %v635
    %v644 = vadd.f32 %v640, %v636
    %v645 = vadd.f32 %v640, %v637
    %646 = vrot.lane.b32.xlu0 %v609, 16
    %v647 = vpop.permute.xlu0 %646
    %648 = vrot.lane.b32.xlu0 %v610, 16
    %v649 = vpop.permute.xlu0 %648
    %650 = vrot.lane.b32.xlu0 %v611, 16
    %v651 = vpop.permute.xlu0 %650
    %652 = vrot.lane.b32.xlu0 %v612, 16
    %v653 = vpop.permute.xlu0 %652
    %v654 = vsel %vm240, %v651, %v653
    %v655 = vsel %vm240, %v649, %v651
    %v656 = vsel %vm240, %v647, %v649
    %v657 = vsel %vm240, %v653, %v647
    %v658 = vsel %vm249, %v657, 0.0
    %v659 = vsel %vm250, %v656, 0.0
    %v660 = vsel %vm251, %v655, 0.0
    %v661 = vsel %vm252, %v654, 0.0
    %662 = vset.pattern.permute.xlu0 1
    %663 = vperm.xlu0 %662, %v68
    %v664 = vpop.permute.xlu0 %663
    %v666 = vmul.f32 %v658, %v664
    %v667 = vmul.f32 %v659, %v664
    %v668 = vmul.f32 %v660, %v664
    %v669 = vmul.f32 %v661, %v664
    %v670 = vadd.f32 %v642, %v666
    %v671 = vadd.f32 %v643, %v667
    %v672 = vadd.f32 %v644, %v668
    %v673 = vadd.f32 %v645, %v669
    %674 = vrot.lane.b32.xlu0 %v609, 15
    %v675 = vpop.permute.xlu0 %674
    %676 = vrot.lane.b32.xlu0 %v610, 15
    %v677 = vpop.permute.xlu0 %676
    %678 = vrot.lane.b32.xlu0 %v611, 15
    %v679 = vpop.permute.xlu0 %678
    %680 = vrot.lane.b32.xlu0 %v612, 15
    %v681 = vpop.permute.xlu0 %680
    %v682 = vsel %vm265, %v679, %v681
    %v683 = vsel %vm265, %v677, %v679
    %v684 = vsel %vm265, %v675, %v677
    %v685 = vsel %vm265, %v681, %v675
    %v686 = vsel %vm274, %v685, 0.0
    %v687 = vsel %vm275, %v684, 0.0
    %v688 = vsel %vm276, %v683, 0.0
    %v689 = vsel %vm277, %v682, 0.0
    %690 = vset.pattern.permute.xlu0 2
    %691 = vperm.xlu0 %690, %v68
    %v692 = vpop.permute.xlu0 %691
    %v694 = vmul.f32 %v686, %v692
    %v695 = vmul.f32 %v687, %v692
    %v696 = vmul.f32 %v688, %v692
    %v697 = vmul.f32 %v689, %v692
    %v698 = vadd.f32 %v670, %v694
    %v699 = vadd.f32 %v671, %v695
    %v700 = vadd.f32 %v672, %v696
    %v701 = vadd.f32 %v673, %v697
    %702 = vrot.lane.b32.xlu0 %v609, 1
    %v703 = vpop.permute.xlu0 %702
    %704 = vrot.lane.b32.xlu0 %v610, 1
    %v705 = vpop.permute.xlu0 %704
    %706 = vrot.lane.b32.xlu0 %v611, 1
    %v707 = vpop.permute.xlu0 %706
    %708 = vrot.lane.b32.xlu0 %v612, 1
    %v709 = vpop.permute.xlu0 %708
    %v710 = vsel %vm290, %v707, %v709
    %v711 = vsel %vm290, %v705, %v707
    %v712 = vsel %vm290, %v703, %v705
    %v713 = vsel %vm290, %v709, %v703
    %v714 = vsel %vm299, %v713, 0.0
    %v715 = vsel %vm300, %v712, 0.0
    %v716 = vsel %vm301, %v711, 0.0
    %v717 = vsel %vm302, %v710, 0.0
    %718 = vset.pattern.permute.xlu0 3
    %719 = vperm.xlu0 %718, %v68
    %v720 = vpop.permute.xlu0 %719
    %v722 = vmul.f32 %v714, %v720
    %v723 = vmul.f32 %v715, %v720
    %v724 = vmul.f32 %v716, %v720
    %v725 = vmul.f32 %v717, %v720
    %v726 = vadd.f32 %v698, %v722
    %v727 = vadd.f32 %v699, %v723
    %v728 = vadd.f32 %v700, %v724
    %v729 = vadd.f32 %v701, %v725
    %730 = vset.pattern.permute.xlu0 4
    %731 = vperm.xlu0 %730, %v68
    %v732 = vpop.permute.xlu0 %731
    %v734 = vmul.f32 %v609, %v732
    %v735 = vmul.f32 %v610, %v732
    %v736 = vmul.f32 %v611, %v732
    %v737 = vmul.f32 %v612, %v732
    %v738 = vadd.f32 %v726, %v734
    %v739 = vadd.f32 %v727, %v735
    %v740 = vadd.f32 %v728, %v736
    %v741 = vadd.f32 %v729, %v737
    %742 = vrot.lane.b32.xlu0 %v609, 127
    %v743 = vpop.permute.xlu0 %742
    %744 = vrot.lane.b32.xlu0 %v610, 127
    %v745 = vpop.permute.xlu0 %744
    %746 = vrot.lane.b32.xlu0 %v611, 127
    %v747 = vpop.permute.xlu0 %746
    %748 = vrot.lane.b32.xlu0 %v612, 127
    %v749 = vpop.permute.xlu0 %748
    %v750 = vsel %vm315, %v747, %v749
    %v751 = vsel %vm315, %v745, %v747
    %v752 = vsel %vm315, %v743, %v745
    %v753 = vsel %vm315, %v749, %v743
    %v754 = vsel %vm324, %v752, 0.0
    %v755 = vsel %vm325, %v751, 0.0
    %v756 = vsel %vm326, %v750, 0.0
    %v757 = vsel %vm327, %v753, 0.0
    %758 = vset.pattern.permute.xlu0 5
    %759 = vperm.xlu0 %758, %v68
    %v760 = vpop.permute.xlu0 %759
    %v762 = vmul.f32 %v754, %v760
    %v763 = vmul.f32 %v755, %v760
    %v764 = vmul.f32 %v756, %v760
    %v765 = vmul.f32 %v757, %v760
    %v766 = vadd.f32 %v738, %v762
    %v767 = vadd.f32 %v739, %v763
    %v768 = vadd.f32 %v740, %v764
    %v769 = vadd.f32 %v741, %v765
    %770 = vrot.lane.b32.xlu0 %v609, 113
    %v771 = vpop.permute.xlu0 %770
    %772 = vrot.lane.b32.xlu0 %v610, 113
    %v773 = vpop.permute.xlu0 %772
    %774 = vrot.lane.b32.xlu0 %v611, 113
    %v775 = vpop.permute.xlu0 %774
    %776 = vrot.lane.b32.xlu0 %v612, 113
    %v777 = vpop.permute.xlu0 %776
    %v778 = vsel %vm340, %v775, %v777
    %v779 = vsel %vm340, %v773, %v775
    %v780 = vsel %vm340, %v771, %v773
    %v781 = vsel %vm340, %v777, %v771
    %v782 = vsel %vm349, %v780, 0.0
    %v783 = vsel %vm350, %v779, 0.0
    %v784 = vsel %vm351, %v778, 0.0
    %v785 = vsel %vm352, %v781, 0.0
    %786 = vset.pattern.permute.xlu0 6
    %787 = vperm.xlu0 %786, %v68
    %v788 = vpop.permute.xlu0 %787
    %v790 = vmul.f32 %v782, %v788
    %v791 = vmul.f32 %v783, %v788
    %v792 = vmul.f32 %v784, %v788
    %v793 = vmul.f32 %v785, %v788
    %v794 = vadd.f32 %v766, %v790
    %v795 = vadd.f32 %v767, %v791
    %v796 = vadd.f32 %v768, %v792
    %v797 = vadd.f32 %v769, %v793
    %798 = vrot.lane.b32.xlu0 %v609, 112
    %v799 = vpop.permute.xlu0 %798
    %800 = vrot.lane.b32.xlu0 %v610, 112
    %v801 = vpop.permute.xlu0 %800
    %802 = vrot.lane.b32.xlu0 %v611, 112
    %v803 = vpop.permute.xlu0 %802
    %804 = vrot.lane.b32.xlu0 %v612, 112
    %v805 = vpop.permute.xlu0 %804
    %v806 = vsel %vm365, %v803, %v805
    %v807 = vsel %vm365, %v801, %v803
    %v808 = vsel %vm365, %v799, %v801
    %v809 = vsel %vm365, %v805, %v799
    %v810 = vsel %vm374, %v808, 0.0
    %v811 = vsel %vm375, %v807, 0.0
    %v812 = vsel %vm376, %v806, 0.0
    %v813 = vsel %vm377, %v809, 0.0
    %814 = vset.pattern.permute.xlu0 7
    %815 = vperm.xlu0 %814, %v68
    %v816 = vpop.permute.xlu0 %815
    %v818 = vmul.f32 %v810, %v816
    %v819 = vmul.f32 %v811, %v816
    %v820 = vmul.f32 %v812, %v816
    %v821 = vmul.f32 %v813, %v816
    %v822 = vadd.f32 %v794, %v818
    %v823 = vadd.f32 %v795, %v819
    %v824 = vadd.f32 %v796, %v820
    %v825 = vadd.f32 %v797, %v821
    %826 = vrot.lane.b32.xlu0 %v609, 111
    %v827 = vpop.permute.xlu0 %826
    %828 = vrot.lane.b32.xlu0 %v610, 111
    %v829 = vpop.permute.xlu0 %828
    %830 = vrot.lane.b32.xlu0 %v611, 111
    %v831 = vpop.permute.xlu0 %830
    %832 = vrot.lane.b32.xlu0 %v612, 111
    %v833 = vpop.permute.xlu0 %832
    %v834 = vsel %vm390, %v831, %v833
    %v835 = vsel %vm390, %v829, %v831
    %v836 = vsel %vm390, %v827, %v829
    %v837 = vsel %vm390, %v833, %v827
    %v838 = vsel %vm399, %v836, 0.0
    %v839 = vsel %vm400, %v835, 0.0
    %v840 = vsel %vm401, %v834, 0.0
    %v841 = vsel %vm402, %v837, 0.0
    %842 = vset.pattern.permute.xlu0 8
    %843 = vperm.xlu0 %842, %v68
    %v844 = vpop.permute.xlu0 %843
    %v846 = vmul.f32 %v838, %v844
    %v847 = vmul.f32 %v839, %v844
    %v848 = vmul.f32 %v840, %v844
    %v849 = vmul.f32 %v841, %v844
    %v850 = vadd.f32 %v822, %v846
    %v851 = vadd.f32 %v823, %v847
    %v852 = vadd.f32 %v824, %v848
    %v853 = vadd.f32 %v825, %v849
    %v854 = vmax.f32 %v850, 0.0
    %v855 = vmax.f32 %v851, 0.0
    %v856 = vmax.f32 %v852, 0.0
    %v857 = vmax.f32 %v853, 0.0
    %v858 = vadd.f32 %v854, %v538
    %v859 = vadd.f32 %v855, %v561
    %v860 = vadd.f32 %v856, %v584
    %v861 = vadd.f32 %v857, %v607
    %862 = vrot.lane.b32.xlu0 %v858, 17
    %v863 = vpop.permute.xlu0 %862
    %864 = vrot.lane.b32.xlu0 %v859, 17
    %v865 = vpop.permute.xlu0 %864
    %866 = vrot.lane.b32.xlu0 %v860, 17
    %v867 = vpop.permute.xlu0 %866
    %868 = vrot.lane.b32.xlu0 %v861, 17
    %v869 = vpop.permute.xlu0 %868
    %v870 = vsel %vm215, %v867, %v869
    %v871 = vsel %vm215, %v865, %v867
    %v872 = vsel %vm215, %v863, %v865
    %v873 = vsel %vm215, %v869, %v863
    %v874 = vsel %vm224, %v873, 0.0
    %v875 = vsel %vm225, %v872, 0.0
    %v876 = vsel %vm226, %v871, 0.0
    %v877 = vsel %vm227, %v870, 0.0
    %879 = vset.pattern.permute.xlu0 0
    %880 = vperm.xlu0 %879, %v69
    %v881 = vpop.permute.xlu0 %880
    %v883 = vmul.f32 %v874, %v881
    %v884 = vmul.f32 %v875, %v881
    %v885 = vmul.f32 %v876, %v881
    %v886 = vmul.f32 %v877, %v881
    %887 = vset.pattern.permute.xlu0 3
    %888 = vperm.xlu0 %887, %v73
    %v889 = vpop.permute.xlu0 %888
    %v891 = vadd.f32 %v889, %v883
    %v892 = vadd.f32 %v889, %v884
    %v893 = vadd.f32 %v889, %v885
    %v894 = vadd.f32 %v889, %v886
    %895 = vrot.lane.b32.xlu0 %v858, 16
    %v896 = vpop.permute.xlu0 %895
    %897 = vrot.lane.b32.xlu0 %v859, 16
    %v898 = vpop.permute.xlu0 %897
    %899 = vrot.lane.b32.xlu0 %v860, 16
    %v900 = vpop.permute.xlu0 %899
    %901 = vrot.lane.b32.xlu0 %v861, 16
    %v902 = vpop.permute.xlu0 %901
    %v903 = vsel %vm240, %v900, %v902
    %v904 = vsel %vm240, %v898, %v900
    %v905 = vsel %vm240, %v896, %v898
    %v906 = vsel %vm240, %v902, %v896
    %v907 = vsel %vm249, %v906, 0.0
    %v908 = vsel %vm250, %v905, 0.0
    %v909 = vsel %vm251, %v904, 0.0
    %v910 = vsel %vm252, %v903, 0.0
    %911 = vset.pattern.permute.xlu0 1
    %912 = vperm.xlu0 %911, %v69
    %v913 = vpop.permute.xlu0 %912
    %v915 = vmul.f32 %v907, %v913
    %v916 = vmul.f32 %v908, %v913
    %v917 = vmul.f32 %v909, %v913
    %v918 = vmul.f32 %v910, %v913
    %v919 = vadd.f32 %v891, %v915
    %v920 = vadd.f32 %v892, %v916
    %v921 = vadd.f32 %v893, %v917
    %v922 = vadd.f32 %v894, %v918
    %923 = vrot.lane.b32.xlu0 %v858, 15
    %v924 = vpop.permute.xlu0 %923
    %925 = vrot.lane.b32.xlu0 %v859, 15
    %v926 = vpop.permute.xlu0 %925
    %927 = vrot.lane.b32.xlu0 %v860, 15
    %v928 = vpop.permute.xlu0 %927
    %929 = vrot.lane.b32.xlu0 %v861, 15
    %v930 = vpop.permute.xlu0 %929
    %v931 = vsel %vm265, %v928, %v930
    %v932 = vsel %vm265, %v926, %v928
    %v933 = vsel %vm265, %v924, %v926
    %v934 = vsel %vm265, %v930, %v924
    %v935 = vsel %vm274, %v934, 0.0
    %v936 = vsel %vm275, %v933, 0.0
    %v937 = vsel %vm276, %v932, 0.0
    %v938 = vsel %vm277, %v931, 0.0
    %939 = vset.pattern.permute.xlu0 2
    %940 = vperm.xlu0 %939, %v69
    %v941 = vpop.permute.xlu0 %940
    %v943 = vmul.f32 %v935, %v941
    %v944 = vmul.f32 %v936, %v941
    %v945 = vmul.f32 %v937, %v941
    %v946 = vmul.f32 %v938, %v941
    %v947 = vadd.f32 %v919, %v943
    %v948 = vadd.f32 %v920, %v944
    %v949 = vadd.f32 %v921, %v945
    %v950 = vadd.f32 %v922, %v946
    %951 = vrot.lane.b32.xlu0 %v858, 1
    %v952 = vpop.permute.xlu0 %951
    %953 = vrot.lane.b32.xlu0 %v859, 1
    %v954 = vpop.permute.xlu0 %953
    %955 = vrot.lane.b32.xlu0 %v860, 1
    %v956 = vpop.permute.xlu0 %955
    %957 = vrot.lane.b32.xlu0 %v861, 1
    %v958 = vpop.permute.xlu0 %957
    %v959 = vsel %vm290, %v956, %v958
    %v960 = vsel %vm290, %v954, %v956
    %v961 = vsel %vm290, %v952, %v954
    %v962 = vsel %vm290, %v958, %v952
    %v963 = vsel %vm299, %v962, 0.0
    %v964 = vsel %vm300, %v961, 0.0
    %v965 = vsel %vm301, %v960, 0.0
    %v966 = vsel %vm302, %v959, 0.0
    %967 = vset.pattern.permute.xlu0 3
    %968 = vperm.xlu0 %967, %v69
    %v969 = vpop.permute.xlu0 %968
    %v971 = vmul.f32 %v963, %v969
    %v972 = vmul.f32 %v964, %v969
    %v973 = vmul.f32 %v965, %v969
    %v974 = vmul.f32 %v966, %v969
    %v975 = vadd.f32 %v947, %v971
    %v976 = vadd.f32 %v948, %v972
    %v977 = vadd.f32 %v949, %v973
    %v978 = vadd.f32 %v950, %v974
    %979 = vset.pattern.permute.xlu0 4
    %980 = vperm.xlu0 %979, %v69
    %v981 = vpop.permute.xlu0 %980
    %v983 = vmul.f32 %v858, %v981
    %v984 = vmul.f32 %v859, %v981
    %v985 = vmul.f32 %v860, %v981
    %v986 = vmul.f32 %v861, %v981
    %v987 = vadd.f32 %v975, %v983
    %v988 = vadd.f32 %v976, %v984
    %v989 = vadd.f32 %v977, %v985
    %v990 = vadd.f32 %v978, %v986
    %991 = vrot.lane.b32.xlu0 %v858, 127
    %v992 = vpop.permute.xlu0 %991
    %993 = vrot.lane.b32.xlu0 %v859, 127
    %v994 = vpop.permute.xlu0 %993
    %995 = vrot.lane.b32.xlu0 %v860, 127
    %v996 = vpop.permute.xlu0 %995
    %997 = vrot.lane.b32.xlu0 %v861, 127
    %v998 = vpop.permute.xlu0 %997
    %v999 = vsel %vm315, %v996, %v998
    %v1000 = vsel %vm315, %v994, %v996
    %v1001 = vsel %vm315, %v992, %v994
    %v1002 = vsel %vm315, %v998, %v992
    %v1003 = vsel %vm324, %v1001, 0.0
    %v1004 = vsel %vm325, %v1000, 0.0
    %v1005 = vsel %vm326, %v999, 0.0
    %v1006 = vsel %vm327, %v1002, 0.0
    %1007 = vset.pattern.permute.xlu0 5
    %1008 = vperm.xlu0 %1007, %v69
    %v1009 = vpop.permute.xlu0 %1008
    %v1011 = vmul.f32 %v1003, %v1009
    %v1012 = vmul.f32 %v1004, %v1009
    %v1013 = vmul.f32 %v1005, %v1009
    %v1014 = vmul.f32 %v1006, %v1009
    %v1015 = vadd.f32 %v987, %v1011
    %v1016 = vadd.f32 %v988, %v1012
    %v1017 = vadd.f32 %v989, %v1013
    %v1018 = vadd.f32 %v990, %v1014
    %1019 = vrot.lane.b32.xlu0 %v858, 113
    %v1020 = vpop.permute.xlu0 %1019
    %1021 = vrot.lane.b32.xlu0 %v859, 113
    %v1022 = vpop.permute.xlu0 %1021
    %1023 = vrot.lane.b32.xlu0 %v860, 113
    %v1024 = vpop.permute.xlu0 %1023
    %1025 = vrot.lane.b32.xlu0 %v861, 113
    %v1026 = vpop.permute.xlu0 %1025
    %v1027 = vsel %vm340, %v1024, %v1026
    %v1028 = vsel %vm340, %v1022, %v1024
    %v1029 = vsel %vm340, %v1020, %v1022
    %v1030 = vsel %vm340, %v1026, %v1020
    %v1031 = vsel %vm349, %v1029, 0.0
    %v1032 = vsel %vm350, %v1028, 0.0
    %v1033 = vsel %vm351, %v1027, 0.0
    %v1034 = vsel %vm352, %v1030, 0.0
    %1035 = vset.pattern.permute.xlu0 6
    %1036 = vperm.xlu0 %1035, %v69
    %v1037 = vpop.permute.xlu0 %1036
    %v1039 = vmul.f32 %v1031, %v1037
    %v1040 = vmul.f32 %v1032, %v1037
    %v1041 = vmul.f32 %v1033, %v1037
    %v1042 = vmul.f32 %v1034, %v1037
    %v1043 = vadd.f32 %v1015, %v1039
    %v1044 = vadd.f32 %v1016, %v1040
    %v1045 = vadd.f32 %v1017, %v1041
    %v1046 = vadd.f32 %v1018, %v1042
    %1047 = vrot.lane.b32.xlu0 %v858, 112
    %v1048 = vpop.permute.xlu0 %1047
    %1049 = vrot.lane.b32.xlu0 %v859, 112
    %v1050 = vpop.permute.xlu0 %1049
    %1051 = vrot.lane.b32.xlu0 %v860, 112
    %v1052 = vpop.permute.xlu0 %1051
    %1053 = vrot.lane.b32.xlu0 %v861, 112
    %v1054 = vpop.permute.xlu0 %1053
    %v1055 = vsel %vm365, %v1052, %v1054
    %v1056 = vsel %vm365, %v1050, %v1052
    %v1057 = vsel %vm365, %v1048, %v1050
    %v1058 = vsel %vm365, %v1054, %v1048
    %v1059 = vsel %vm374, %v1057, 0.0
    %v1060 = vsel %vm375, %v1056, 0.0
    %v1061 = vsel %vm376, %v1055, 0.0
    %v1062 = vsel %vm377, %v1058, 0.0
    %1063 = vset.pattern.permute.xlu0 7
    %1064 = vperm.xlu0 %1063, %v69
    %v1065 = vpop.permute.xlu0 %1064
    %v1067 = vmul.f32 %v1059, %v1065
    %v1068 = vmul.f32 %v1060, %v1065
    %v1069 = vmul.f32 %v1061, %v1065
    %v1070 = vmul.f32 %v1062, %v1065
    %v1071 = vadd.f32 %v1043, %v1067
    %v1072 = vadd.f32 %v1044, %v1068
    %v1073 = vadd.f32 %v1045, %v1069
    %v1074 = vadd.f32 %v1046, %v1070
    %1075 = vrot.lane.b32.xlu0 %v858, 111
    %v1076 = vpop.permute.xlu0 %1075
    %1077 = vrot.lane.b32.xlu0 %v859, 111
    %v1078 = vpop.permute.xlu0 %1077
    %1079 = vrot.lane.b32.xlu0 %v860, 111
    %v1080 = vpop.permute.xlu0 %1079
    %1081 = vrot.lane.b32.xlu0 %v861, 111
    %v1082 = vpop.permute.xlu0 %1081
    %v1083 = vsel %vm390, %v1080, %v1082
    %v1084 = vsel %vm390, %v1078, %v1080
    %v1085 = vsel %vm390, %v1076, %v1078
    %v1086 = vsel %vm390, %v1082, %v1076
    %v1087 = vsel %vm399, %v1085, 0.0
    %v1088 = vsel %vm400, %v1084, 0.0
    %v1089 = vsel %vm401, %v1083, 0.0
    %v1090 = vsel %vm402, %v1086, 0.0
    %1091 = vset.pattern.permute.xlu0 8
    %1092 = vperm.xlu0 %1091, %v69
    %v1093 = vpop.permute.xlu0 %1092
    %v1095 = vmul.f32 %v1087, %v1093
    %v1096 = vmul.f32 %v1088, %v1093
    %v1097 = vmul.f32 %v1089, %v1093
    %v1098 = vmul.f32 %v1090, %v1093
    %v1099 = vadd.f32 %v1071, %v1095
    %v1100 = vadd.f32 %v1072, %v1096
    %v1101 = vadd.f32 %v1073, %v1097
    %v1102 = vadd.f32 %v1074, %v1098
    %v1103 = vmax.f32 %v1099, 0.0
    %v1104 = vmax.f32 %v1100, 0.0
    %v1105 = vmax.f32 %v1101, 0.0
    %v1106 = vmax.f32 %v1102, 0.0
    %1107 = vset.pattern.permute.xlu0 4
    %1108 = vperm.xlu0 %1107, %v73
    %v1109 = vpop.permute.xlu0 %1108
    %vm1111 = vcmask 261120
    %v1113 = vsel %vm1111, %v70, 0
    %1115 = vmatpush.msra.mxu0 0.0
    %1116 = vmatpush.msra.mxu0 0.0
    %1117 = vmatpush.msra.mxu0 0.0
    %1118 = vmatpush.msra.mxu0 0.0
    %1119 = vmatpush.msra.mxu0 0.0
    %1120 = vmatpush.msra.mxu0 0.0
    %1121 = vmatpush.msra.mxu0 0.0
    %1122 = vmatpush.msra.mxu0 0.0
    %1123 = vmatpush.msra.mxu0 0.0
    %1124 = vmatpush.msra.mxu0 0.0
    %1125 = vmatpush.msra.mxu0 0.0
    %1126 = vmatpush.msra.mxu0 0.0
    %1127 = vmatpush.msra.mxu0 %v1103
    %1128 = vmatpush.msra.mxu0 %v854
    %1129 = vmatpush.msra.mxu0 %v496
    %1130 = vmatpush.msra.mxu0 %v60
    %1131 = vmatmul.f32.gmra.mxu0 %v1113
    %v1132 = vpop.f32.mrf.mxu0
    %v1133 = vadd.f32 %v1109, %v1132
    %1134 = vdwg.mxu0
    %1135 = vmatpush.msra.mxu0 0.0
    %1136 = vmatpush.msra.mxu0 0.0
    %1137 = vmatpush.msra.mxu0 0.0
    %1138 = vmatpush.msra.mxu0 0.0
    %1139 = vmatpush.msra.mxu0 0.0
    %1140 = vmatpush.msra.mxu0 0.0
    %1141 = vmatpush.msra.mxu0 0.0
    %1142 = vmatpush.msra.mxu0 0.0
    %1143 = vmatpush.msra.mxu0 0.0
    %1144 = vmatpush.msra.mxu0 0.0
    %1145 = vmatpush.msra.mxu0 0.0
    %1146 = vmatpush.msra.mxu0 0.0
    %1147 = vmatpush.msra.mxu0 %v1104
    %1148 = vmatpush.msra.mxu0 %v855
    %1149 = vmatpush.msra.mxu0 %v497
    %1150 = vmatpush.msra.mxu0 %v61
    %1151 = vmatmul.f32.gmra.mxu0 %v1113
    %v1152 = vpop.f32.mrf.mxu0
    %v1153 = vadd.f32 %v1109, %v1152
    %1154 = vdwg.mxu0
    %1155 = vmatpush.msra.mxu0 0.0
    %1156 = vmatpush.msra.mxu0 0.0
    %1157 = vmatpush.msra.mxu0 0.0
    %1158 = vmatpush.msra.mxu0 0.0
    %1159 = vmatpush.msra.mxu0 0.0
    %1160 = vmatpush.msra.mxu0 0.0
    %1161 = vmatpush.msra.mxu0 0.0
    %1162 = vmatpush.msra.mxu0 0.0
    %1163 = vmatpush.msra.mxu0 0.0
    %1164 = vmatpush.msra.mxu0 0.0
    %1165 = vmatpush.msra.mxu0 0.0
    %1166 = vmatpush.msra.mxu0 0.0
    %1167 = vmatpush.msra.mxu0 %v1105
    %1168 = vmatpush.msra.mxu0 %v856
    %1169 = vmatpush.msra.mxu0 %v498
    %1170 = vmatpush.msra.mxu0 %v63
    %1171 = vmatmul.f32.gmra.mxu0 %v1113
    %v1172 = vpop.f32.mrf.mxu0
    %v1173 = vadd.f32 %v1109, %v1172
    %1174 = vdwg.mxu0
    %1175 = vmatpush.msra.mxu0 0.0
    %1176 = vmatpush.msra.mxu0 0.0
    %1177 = vmatpush.msra.mxu0 0.0
    %1178 = vmatpush.msra.mxu0 0.0
    %1179 = vmatpush.msra.mxu0 0.0
    %1180 = vmatpush.msra.mxu0 0.0
    %1181 = vmatpush.msra.mxu0 0.0
    %1182 = vmatpush.msra.mxu0 0.0
    %1183 = vmatpush.msra.mxu0 0.0
    %1184 = vmatpush.msra.mxu0 0.0
    %1185 = vmatpush.msra.mxu0 0.0
    %1186 = vmatpush.msra.mxu0 0.0
    %1187 = vmatpush.msra.mxu0 %v1106
    %1188 = vmatpush.msra.mxu0 %v857
    %1189 = vmatpush.msra.mxu0 %v499
    %1190 = vmatpush.msra.mxu0 %v64
    %1191 = vmatmul.f32.gmra.mxu0 %v1113
    %v1192 = vpop.f32.mrf.mxu0
    %v1193 = vadd.f32 %v1109, %v1192
    %1194 = vdwg.mxu0
    %v1195 = vmax.f32 %v1133, 0.0
    %v1196 = vmax.f32 %v1153, 0.0
    %v1197 = vmax.f32 %v1173, 0.0
    %v1198 = vmax.f32 %v1193, 0.0
    %s1199 = sld [smem:[#allocation8]]
    %s1200 = sld [smem:[#allocation8 + $0x1]]
    %s1201 = sld [smem:[#allocation8 + $0x2]]
    %v1202 = vadd.f32 %v1195, %v1196
    %1203 = vadd.xlane.f32.xlu0 %v1202
    %v1204 = vpop.xlane.xlu0 %1203
    %v1205 = vrcp.pop 256.0
    %v1206 = vmul.f32 256.0, %v1205
    %v1207 = vsub.f32 1.0, %v1206
    %v1208 = vmul.f32 %v1205, %v1207
    %v1209 = vadd.f32 %v1205, %v1208
    %vm1210 = vweird.f32 %v1205
    %v1211 = vsel %vm1210, %v1205, %v1209
    %v1212 = vmul.f32 %v1204, %v1211
    %v1213 = vadd.f32 %v1197, %v1198
    %1214 = vadd.xlane.f32.xlu0 %v1213
    %v1215 = vpop.xlane.xlu0 %1214
    %v1216 = vmul.f32 %v1215, %v1211
    %vm1217 = vcmask 7168
    %v1218 = vsel %vm1217, %v1212, %v1216
    %v1219 = vlaneseq
    %v1220 = vshrl.u32 %v1219, 7
    %vm1221 = vcmp.ge.s32.totalorder %v1220, 1
    %v1222 = vrot.slane %v1218, 7
    %v1223 = vsel %vm1221, %v1222, 0.0
    %vm1224 = vcmp.le.s32.totalorder %v1220, 6
    %v1225 = vrot.slane %v1218, 1
    %v1226 = vsel %vm1224, %v1225, 0.0
    %v1227 = vstv %s1199
    %v1228 = vmul.f32 %v1227, %v1223
    %v1229 = vstv %s1200
    %v1230 = vmul.f32 %v1229, %v1218
    %v1231 = vadd.f32 %v1228, %v1230
    %v1232 = vstv %s1201
    %v1233 = vmul.f32 %v1232, %v1226
    %v1234 = vadd.f32 %v1231, %v1233
    %v1235 = vxor.u32 %v1234, 2147483648
    %v1236 = vmul.f32 %v1235, 1.442695
    %v1237 = vpow.pop %v1236
    %v1238 = vadd.f32 %v1237, 1.0
    %v1239 = vrcp.pop %v1238
    %v1240 = vmul.f32 %v1238, %v1239
    %v1241 = vsub.f32 1.0, %v1240
    %v1242 = vmul.f32 %v1239, %v1241
    %v1243 = vadd.f32 %v1239, %v1242
    %vm1244 = vweird.f32 %v1238
    %vm1245 = vweird.f32 %v1239
    %vm1246 = vmor %vm1244, %vm1245
    %v1247 = vsel %vm1246, %v1239, %v1243
    %v1248 = vand.u32 2147483647, %v1238
    %vm1249 = vcmp.eq.f32.partialorder %v1248, 8.507059e+37
    %v1250 = vand.u32 %v1238, 2147483648
    %v1251 = vor.u32 1.1754944e-38, %v1250
    %v1252 = vsel %vm1249, %v1251, %v1247
    %v1253 = vmul.f32 1.0, %v1252
    %vm1254 = vcmp.ge.s32.totalorder %v75, 256
    %vm1255 = vcmp.ge.s32.totalorder %v76, 256
    %vm1256 = vcmp.ge.s32.totalorder %v77, 256
    %vm1257 = vcmp.ge.s32.totalorder %v78, 256
    %v1258 = vsel %vm1254, 1, 0
    %v1259 = vsel %vm1255, 1, 0
    %v1260 = vsel %vm1256, 1, 0
    %v1261 = vsel %vm1257, 1, 0
    %vm1262 = vcmp.eq.s32.totalorder %v1258, 1
    %vm1263 = vcmp.eq.s32.totalorder %v1259, 1
    %vm1264 = vcmp.eq.s32.totalorder %v1260, 1
    %vm1265 = vcmp.eq.s32.totalorder %v1261, 1
    %1267 = vset.pattern.permute.xlu0 1
    %1268 = vperm.xlu0 %1267, %v1253
    %v1269 = vpop.permute.xlu0 %1268
    %1271 = vset.pattern.permute.xlu0 0
    %1272 = vperm.xlu0 %1271, %v1253
    %v1273 = vpop.permute.xlu0 %1272
    %v1275 = vsel %vm1262, %v1269, %v1273
    %v1276 = vsel %vm1263, %v1269, %v1273
    %v1277 = vsel %vm1264, %v1269, %v1273
    %v1278 = vsel %vm1265, %v1269, %v1273
    %v1279 = vmul.f32 %v1195, %v1275
    %v1280 = vmul.f32 %v1196, %v1276
    %v1281 = vmul.f32 %v1197, %v1277
    %v1282 = vmul.f32 %v1198, %v1278
    %v1283 = vadd.f32 %v1279, %v60
    %v1284 = vadd.f32 %v1280, %v61
    %v1285 = vadd.f32 %v1281, %v63
    %v1286 = vadd.f32 %v1282, %v64
    %1287 = vst [vmem:[#allocation9] sm:$0xff] %v1283
    %1288 = vst [vmem:[#allocation9 + $0x8] sm:$0xff] %v1284
    %s1289 = scalar_lea.vmem [#allocation9], 16
    %1290 = vst [vmem:[%s1289] sm:$0xff] %v1285
    %1291 = vst [vmem:[%s1289 + $0x8] sm:$0xff] %v1286
    // Predicated region
    $region26: #{tpu_custom_call.1} parent=1 // pred_check
      _
    $region27: #{tpu_custom_call.1} parent=1 // pred_check_branch
      %1293 = sbr.rel (0) target = $region29
    $region28: #{tpu_custom_call.1} parent=1 // pred_region
      %1295 = vsyncadd [#allocation4], 0
      %s1296 = sshll.u32 [#allocation9], 4
      %s1297 = int_to_ptr.vmem [resolvable:$true] %s1296
      %s1298 = sshll.u32 %s3, 4
      %s1299 = int_to_ptr.hbm [resolvable:$true] %s1298
      %1304 = dma.vmem_to_hbm [thread:$0]  %s1297, 512, %s1299, [#allocation4], 256, 256, 16
    $region29: #{tpu_custom_call.1} parent=1 // pred_fallthru
      _
    // Predicated region
    $region30: #{tpu_custom_call.1} parent=1 // pred_check
      _
    $region31: #{tpu_custom_call.1} parent=1 // pred_check_branch
      %1306 = sbr.rel (0) target = $region33
    $region32: #{tpu_custom_call.1} parent=1 // pred_region
      %1308 = dma.done [#allocation4], 512
    $region33: #{tpu_custom_call.1} parent=1 // pred_fallthru
      _
    %1309 = vsyncpa [#allocation3], 1
    %1310 = vsyncpa [#allocation7], 1
    %1311 = vsyncpa [#allocation4], 1
    %1312 = vsyncpa [#allocation5], 1

</llo_original>
